<compile_context>
chip_gen: v5e
topology: v5e:2x2
jax: 0.10.0
libtpu: 0.0.40
codegen_flags: <defaults>
</compile_context>

<pallas_src>
import functools

import jax
import jax.numpy as jnp
from jax.experimental import pallas as pl
from jax.experimental.pallas import tpu as pltpu

# Hyper-params implied by the module: fc1 has 256 in-features and the concat of
# the four branches gives 64 channels, so features // 5 == 4 -> features = 20.
SEQ = 4                 # Conv1d input channels ("sequence")
FEAT = 20               # Conv1d spatial length ("features")
NUM_CLASS = 10
POOL_OUT = FEAT // 5    # = 4

CH_STRIDE = 32          # per-channel lane stride (4 * 32 = 128 lanes, lane dense)
SLP = SEQ * CH_STRIDE   # padded flattened sample width = 128
BR = 16 * FEAT          # per-branch flattened output width = 320
CONC = 4 * BR           # concat of the 4 branches = 1280
OUT_PAD = 128           # padded logits width (lane-dense store)
NEG = -1e30             # stands in for -inf (finite in f32 AND bf16)


def _round_up(n, m):
    return ((n + m - 1) // m) * m


# --------------------------------- kernel ----------------------------------
def _ntcnn_kernel(x_ref, wx_ref, bx_ref, wp_ref, bp_ref,
                  f1a_ref, f1b_ref, b1_ref, w2_ref, b2_ref, w3_ref, b3_ref,
                  o_ref):
    f32 = jnp.float32
    bf16 = jnp.bfloat16
    # bf16 operands, f32 accumulation (weights are already bf16).
    mm = lambda a, b: jnp.dot(a.astype(bf16), b, preferred_element_type=f32)

    x = x_ref[...]                                   # (BT, 128) f32: 4 ch x 32 lanes, pads = -1e30

    # MaxPool1d(3, stride=1, padding=1) per channel, entirely on VPU/XLU (f32).
    # The -1e30 pad lanes between channels make the circular rolls carry the
    # correct -inf boundary behaviour at l=0 and l=FEAT-1.
    x_prev = pltpu.roll(x, shift=1, axis=1)          # value of left neighbour
    x_next = pltpu.roll(x, shift=SLP - 1, axis=1)    # value of right neighbour
    xm = jnp.maximum(x, jnp.maximum(x_prev, x_next))

    # Conv branches (pre-ReLU) with structural zeros removed:
    #   wbr_x: x  -> [branch1x1 | branch3x3 | branch5x5]   (BT, 960)
    #   wbr_p: xm -> [branch_pool]                          (BT, 320)
    h_a = jnp.maximum(mm(x, wx_ref[...]) + bx_ref[...], 0.0)
    h_b = jnp.maximum(mm(xm, wp_ref[...]) + bp_ref[...], 0.0)

    # AvgPool1d(5,5) + flatten + fc1 folded, split to match the branch split
    # (sum of two matmuls instead of materializing a (BT,1280) concat).
    h1 = jnp.maximum(mm(h_a, f1a_ref[...]) + mm(h_b, f1b_ref[...]) + b1_ref[...], 0.0)
    h2 = jnp.maximum(mm(h1, w2_ref[...]) + b2_ref[...], 0.0)      # (BT, 64)
    o_ref[...] = mm(h2, w3_ref[...]) + b3_ref[...]                # (BT, 128), lane-dense store


# ----------------------------- parameter init ------------------------------
def init_params(key, seq=SEQ, num_class=NUM_CLASS):
    ks = jax.random.split(key, 18)
    n = lambda k, shape: 0.1 * jax.random.normal(k, shape, jnp.float32)
    p = {}
    p['w1x1'] = n(ks[0], (16, seq, 1));  p['b1x1'] = n(ks[1], (16,))
    p['w3a'] = n(ks[2], (24, seq, 1));   p['b3a'] = n(ks[3], (24,))
    p['w3b'] = n(ks[4], (16, 24, 3));    p['b3b'] = n(ks[5], (16,))
    p['w5a'] = n(ks[6], (8, seq, 1));    p['b5a'] = n(ks[7], (8,))
    p['w5b'] = n(ks[8], (16, 8, 5));     p['b5b'] = n(ks[9], (16,))
    p['wp'] = n(ks[10], (16, seq, 1));   p['bp'] = n(ks[11], (16,))
    p['wfc1'] = n(ks[12], (128, 256));   p['bfc1'] = n(ks[13], (128,))
    p['wfc2'] = n(ks[14], (64, 128));    p['bfc2'] = n(ks[15], (64,))
    p['wfc3'] = n(ks[16], (num_class, 64)); p['bfc3'] = n(ks[17], (num_class,))
    return p


# ----------------------- one-time weight folding (host) --------------------
def prepare_folded_params(p):
    """Fold convs / pooling / fc1 into a few matrices. Call once per weight set.

    Returns (in kernel-argument order):
      wbr_x (128,960) bf16, ba_x (1,960) f32,
      wbr_p (128,320) bf16, ba_p (1,320) f32,
      f1a (960,128) bf16, f1b (320,128) bf16, bfc1 (1,128) f32,
      w2 (128,64) bf16, bfc2 (1,64) f32,
      w3 (64,128) bf16 (zero-padded cols), bfc3 (1,128) f32 (zero-padded).
    """
    f32 = jnp.float32
    bf16 = jnp.bfloat16
    L, S = FEAT, SEQ
    I_L = jnp.eye(L, dtype=f32)
    r = jnp.arange(L)

    def shift_mats(K, center):
        # S_k[k, l, p] = 1 iff p == l + (k - center)   (zero outside range)
        return jnp.stack([(r[None, :] == (r[:, None] + (k - center))).astype(f32)
                          for k in range(K)])

    def conv_k1_fold(w, b):
        # Conv1d(S -> Cout, k=1):  W[c, p, o, l] = w[o, c] * delta(p, l)
        W = jnp.einsum('oc,pl->cpol', w[:, :, 0].astype(f32), I_L)     # (S, L, Cout, L)
        bias = jnp.broadcast_to(b.astype(f32)[:, None], (w.shape[0], L))
        return W.reshape(S, L, -1), bias.reshape(-1)

    def conv_k1_kN_fold(wa, ba, wb, bb, K):
        # Conv1d(S -> M, k=1) then Conv1d(M -> Cout, k=K, padding=K//2),
        # zero padding applied to the *biased* intermediate (PyTorch semantics).
        wa2 = wa[:, :, 0].astype(f32)                                  # (M, S)
        wb = wb.astype(f32)
        S_k = shift_mats(K, K // 2)                                    # (K, L, L)
        Mk = jnp.einsum('mc,omk->cok', wa2, wb)                        # (S, Cout, K)
        W = jnp.einsum('cok,klp->cpol', Mk, S_k)                       # (S, L, Cout, L)
        valid = S_k.sum(-1)                                            # (K, L) in-range taps
        tk = jnp.einsum('omk,m->ok', wb, ba.astype(f32))               # (Cout, K)
        bias = bb.astype(f32)[:, None] + jnp.einsum('ok,kl->ol', tk, valid)
        return W.reshape(S, L, -1), bias.reshape(-1)

    def embed_rows(Wslb):
        # (S, L, BR) -> (S*CH_STRIDE=128, BR): rows c*32+l for l<L, zero pad rows
        # (the zero rows absorb the -1e30 pad lanes; zeros survive the bf16 cast).
        z = jnp.zeros((S, CH_STRIDE, Wslb.shape[-1]), f32)
        return z.at[:, :L, :].set(Wslb).reshape(S * CH_STRIDE, -1)

    W1, bias1 = conv_k1_fold(p['w1x1'], p['b1x1'])
    W3, bias3 = conv_k1_kN_fold(p['w3a'], p['b3a'], p['w3b'], p['b3b'], 3)
    W5, bias5 = conv_k1_kN_fold(p['w5a'], p['b5a'], p['w5b'], p['b5b'], 5)
    Wp, biasp = conv_k1_fold(p['wp'], p['bp'])

    # No zero blocks: x sees the 3 "conv" branches, xm only the pool branch.
    wbr_x = jnp.concatenate([embed_rows(W1), embed_rows(W3), embed_rows(W5)], axis=1)  # (128, 960)
    wbr_p = embed_rows(Wp)                                                             # (128, 320)
    ba_x = jnp.concatenate([bias1, bias3, bias5])[None, :]                             # (1, 960)
    ba_p = biasp[None, :]                                                              # (1, 320)

    # AvgPool1d(5,5) + flatten + fc1 folded: fc1_eff[cc*L + l, o] = wfc1[o, cc*4 + l//5] / 5
    wfc1_r = p['wfc1'].astype(f32).reshape(128, 64, POOL_OUT)          # [o, cc, j]
    fc1_eff = jnp.transpose(wfc1_r, (1, 2, 0))                         # (64, 4, 128)
    fc1_eff = jnp.repeat(fc1_eff[:, :, None, :], 5, axis=2)            # (64, 4, 5, 128)
    fc1_eff = (fc1_eff.reshape(64, FEAT, 128) / 5.0).reshape(CONC, 128)
    f1a = fc1_eff[:3 * BR]                                             # (960, 128)
    f1b = fc1_eff[3 * BR:]                                             # (320, 128)
    bfc1 = p['bfc1'].astype(f32)[None, :]                              # (1, 128)

    w2 = p['wfc2'].astype(f32).T                                       # (128, 64)
    bfc2 = p['bfc2'].astype(f32)[None, :]                              # (1, 64)

    nc = p['wfc3'].shape[0]
    w3p = jnp.zeros((64, OUT_PAD), f32).at[:, :nc].set(p['wfc3'].astype(f32).T)
    b3p = jnp.zeros((1, OUT_PAD), f32).at[:, :nc].set(p['bfc3'].astype(f32)[None, :])

    # Weights -> bf16 (MXU-native); biases stay f32 (added after f32 accumulation).
    return (wbr_x.astype(bf16), ba_x,
            wbr_p.astype(bf16), ba_p,
            f1a.astype(bf16), f1b.astype(bf16), bfc1,
            w2.astype(bf16), bfc2,
            w3p.astype(bf16), b3p)


# ------------------------------ tile selection ------------------------------
def _pick_bt(B, b_tile):
    """Batch-tile size: multiple of 16 (bf16 sublane packing), default 512."""
    b16 = _round_up(max(B, 1), 16)
    bt = max(16, min((b_tile // 16) * 16, b16))
    # v7x dual-TC: if the whole batch would fit in a single tile but is large
    # enough that each half still keeps the MXU fed, split into >= 2 grid steps
    # so the "parallel" batch axis can shard across both TensorCores.
    if b16 <= bt and b16 >= 256:
        bt = _round_up((b16 + 1) // 2, 16)
    return bt


# --------------------------------- wrapper ---------------------------------
@functools.partial(jax.jit, static_argnames=("b_tile",))
def ntcnn_pallas(x, folded, b_tile=512):
    """x: (B, SEQ, FEAT) float32 -> (B, NUM_CLASS) float32.

    Jitted end-to-end so lane/batch padding and the output slice fuse with the
    pallas_call instead of materializing extra HBM slabs.
    """
    B = x.shape[0]
    x = x.reshape(B, SEQ, FEAT).astype(jnp.float32)

    # Lane-dense padded sample layout: 4 channels x 32 lanes, pad lanes = -1e30.
    x_pad = jnp.full((B, SEQ, CH_STRIDE), NEG, jnp.float32).at[:, :, :FEAT].set(x)
    x_pad = x_pad.reshape(B, SLP)

    bt = _pick_bt(B, b_tile)
    B_pad = _round_up(B, bt)
    if B_pad != B:
        x_pad = jnp.pad(x_pad, ((0, B_pad - B), (0, 0)))
    grid = (B_pad // bt,)

    in_specs = [pl.BlockSpec((bt, SLP), lambda b: (b, 0))]
    for a in folded:
        # Weights/biases: full-array blocks with constant index_map -> DMA'd
        # once and kept resident in VMEM across the whole grid.
        in_specs.append(pl.BlockSpec(a.shape, lambda b, _n=a.ndim: (0,) * _n))

    out = pl.pallas_call(
        _ntcnn_kernel,
        grid=grid,
        in_specs=in_specs,
        out_specs=pl.BlockSpec((bt, OUT_PAD), lambda b: (b, 0)),
        out_shape=jax.ShapeDtypeStruct((B_pad, OUT_PAD), jnp.float32),
        compiler_params=pltpu.CompilerParams(
            dimension_semantics=("parallel",)),
    )(x_pad, *folded)

    return out[:B, :NUM_CLASS]


# ----------------------- pure-JAX reference (NCL layout) -------------------
def _conv1d_ref(x, w, b, pad):
    B, Cin, L = x.shape
    Cout, _, K = w.shape
    xp = jnp.pad(x, ((0, 0), (0, 0), (pad, pad)))
    out = jnp.zeros((B, Cout, L), jnp.float32)
    for k in range(K):
        out = out + jnp.einsum('oc,bcl->bol', w[:, :, k], xp[:, :, k:k + L])
    return out + b[None, :, None]


def ntcnn_reference(x, p):
    B, _, L = x.shape
    br1 = jnp.maximum(_conv1d_ref(x, p['w1x1'], p['b1x1'], 0), 0.0)
    a3 = _conv1d_ref(x, p['w3a'], p['b3a'], 0)
    br3 = jnp.maximum(_conv1d_ref(a3, p['w3b'], p['b3b'], 1), 0.0)
    a5 = _conv1d_ref(x, p['w5a'], p['b5a'], 0)
    br5 = jnp.maximum(_conv1d_ref(a5, p['w5b'], p['b5b'], 2), 0.0)
    xp = jnp.pad(x, ((0, 0), (0, 0), (1, 1)), constant_values=-jnp.inf)
    mp = jnp.maximum(jnp.maximum(xp[:, :, 0:L], xp[:, :, 1:L + 1]), xp[:, :, 2:L + 2])
    brp = jnp.maximum(_conv1d_ref(mp, p['wp'], p['bp'], 0), 0.0)
    co = jnp.concatenate([br1, br3, br5, brp], axis=1)        # (B, 64, L)
    pool = co.reshape(B, 64, L // 5, 5).mean(-1)              # (B, 64, 4)
    flat = pool.reshape(B, 256)
    h1 = jnp.maximum(flat @ p['wfc1'].T + p['bfc1'], 0.0)
    h2 = jnp.maximum(h1 @ p['wfc2'].T + p['bfc2'], 0.0)
    return h2 @ p['wfc3'].T + p['bfc3']


if __name__ == "__main__":
    key = jax.random.PRNGKey(0)
    kx, kp = jax.random.split(key)
    params = init_params(kp)
    folded = prepare_folded_params(params)        # one-time weight folding

    # bf16 matmul operands (f32 accumulation) -> slightly looser parity bound.
    ATOL = RTOL = 3e-2

    # Small batch (pads to one 16-row tile).
    x = 0.5 * jax.random.normal(kx, (2, SEQ, FEAT), jnp.float32)
    out = jax.block_until_ready(ntcnn_pallas(x, folded))
    ref = jax.block_until_ready(ntcnn_reference(x, params))
    assert out.shape == (2, NUM_CLASS)
    assert jnp.allclose(out, ref, atol=ATOL, rtol=RTOL), (
        f"mismatch: max abs diff {jnp.max(jnp.abs(out - ref))}")

    # Non-multiple batch with a multi-step grid (exercises padding + tiling).
    x2 = jax.random.normal(jax.random.PRNGKey(1), (37, SEQ, FEAT), jnp.float32)
    out2 = jax.block_until_ready(ntcnn_pallas(x2, folded, b_tile=16))
    ref2 = jax.block_until_ready(ntcnn_reference(x2, params))
    assert out2.shape == (37, NUM_CLASS)
    assert jnp.allclose(out2, ref2, atol=ATOL, rtol=RTOL), (
        f"mismatch: max abs diff {jnp.max(jnp.abs(out2 - ref2))}")

    print("KERNEL_OK")
</pallas_src>

<mosaic_0001>
module attributes {stable_mosaic.version = 11 : i64} {
  func.func @_ntcnn_kernel(%arg0: i32, %arg1: memref<16x128xf32, #tpu.memory_space<vmem>>, %arg2: memref<128x960xbf16, #tpu.memory_space<vmem>>, %arg3: memref<1x960xf32, #tpu.memory_space<vmem>>, %arg4: memref<128x320xbf16, #tpu.memory_space<vmem>>, %arg5: memref<1x320xf32, #tpu.memory_space<vmem>>, %arg6: memref<960x128xbf16, #tpu.memory_space<vmem>>, %arg7: memref<320x128xbf16, #tpu.memory_space<vmem>>, %arg8: memref<1x128xf32, #tpu.memory_space<vmem>>, %arg9: memref<128x64xbf16, #tpu.memory_space<vmem>>, %arg10: memref<1x64xf32, #tpu.memory_space<vmem>>, %arg11: memref<64x128xbf16, #tpu.memory_space<vmem>>, %arg12: memref<1x128xf32, #tpu.memory_space<vmem>>, %arg13: memref<16x128xf32, #tpu.memory_space<vmem>>) attributes {dimension_semantics = [#tpu.dimension_semantics<parallel>], iteration_bounds = array<i64: 1>, scalar_prefetch = 0 : i64, scratch_operands = 0 : i64, tpu.core_type = #tpu.core_type<tc>, window_params = [{transform_indices = @transform_0, window_bounds = array<i64: 16, 128>}, {pipeline_mode = #tpu.pipeline_mode<synchronous>, transform_indices = @transform_1, window_bounds = array<i64: 128, 960>}, {pipeline_mode = #tpu.pipeline_mode<synchronous>, transform_indices = @transform_2, window_bounds = array<i64: 1, 960>}, {pipeline_mode = #tpu.pipeline_mode<synchronous>, transform_indices = @transform_3, window_bounds = array<i64: 128, 320>}, {pipeline_mode = #tpu.pipeline_mode<synchronous>, transform_indices = @transform_4, window_bounds = array<i64: 1, 320>}, {pipeline_mode = #tpu.pipeline_mode<synchronous>, transform_indices = @transform_5, window_bounds = array<i64: 960, 128>}, {pipeline_mode = #tpu.pipeline_mode<synchronous>, transform_indices = @transform_6, window_bounds = array<i64: 320, 128>}, {pipeline_mode = #tpu.pipeline_mode<synchronous>, transform_indices = @transform_7, window_bounds = array<i64: 1, 128>}, {pipeline_mode = #tpu.pipeline_mode<synchronous>, transform_indices = @transform_8, window_bounds = array<i64: 128, 64>}, {pipeline_mode = #tpu.pipeline_mode<synchronous>, transform_indices = @transform_9, window_bounds = array<i64: 1, 64>}, {pipeline_mode = #tpu.pipeline_mode<synchronous>, transform_indices = @transform_10, window_bounds = array<i64: 64, 128>}, {pipeline_mode = #tpu.pipeline_mode<synchronous>, transform_indices = @transform_11, window_bounds = array<i64: 1, 128>}, {transform_indices = @transform_12, window_bounds = array<i64: 16, 128>}]} {
    %c0 = arith.constant 0 : index
    %c0_0 = arith.constant 0 : index
    %0 = vector.load %arg1[%c0, %c0_0] : memref<16x128xf32, #tpu.memory_space<vmem>>, vector<16x128xf32>
    %c1_i32 = arith.constant 1 : i32
    %1 = tpu.dynamic_rotate %0 by %c1_i32 dim 1 : vector<16x128xf32>, i32 -> vector<16x128xf32>
    %c127_i32 = arith.constant 127 : i32
    %2 = tpu.dynamic_rotate %0 by %c127_i32 dim 1 : vector<16x128xf32>, i32 -> vector<16x128xf32>
    %3 = arith.maximumf %1, %2 : vector<16x128xf32>
    %4 = arith.maximumf %0, %3 : vector<16x128xf32>
    %c0_1 = arith.constant 0 : index
    %c0_2 = arith.constant 0 : index
    %5 = vector.load %arg2[%c0_1, %c0_2] : memref<128x960xbf16, #tpu.memory_space<vmem>>, vector<128x960xbf16>
    %6 = arith.truncf %0 : vector<16x128xf32> to vector<16x128xbf16>
    %cst = arith.constant dense<0.000000e+00> : vector<16x960xf32>
    %7 = tpu.matmul %6, %5, %cst {dimension_numbers = #tpu.dot_dimension_numbers<[1], [0], [0], [1], [0, 0, 1, 1], [], []>} : vector<16x128xbf16>, vector<128x960xbf16>, vector<16x960xf32> -> vector<16x960xf32>
    %c0_3 = arith.constant 0 : index
    %c0_4 = arith.constant 0 : index
    %8 = vector.load %arg3[%c0_3, %c0_4] : memref<1x960xf32, #tpu.memory_space<vmem>>, vector<1x960xf32>
    %9 = vector.broadcast %8 : vector<1x960xf32> to vector<16x960xf32>
    %10 = arith.addf %7, %9 : vector<16x960xf32>
    %cst_5 = arith.constant 0.000000e+00 : f32
    %11 = vector.broadcast %cst_5 : f32 to vector<16x960xf32>
    %12 = arith.maximumf %10, %11 : vector<16x960xf32>
    %c0_6 = arith.constant 0 : index
    %c0_7 = arith.constant 0 : index
    %13 = vector.load %arg4[%c0_6, %c0_7] : memref<128x320xbf16, #tpu.memory_space<vmem>>, vector<128x320xbf16>
    %14 = arith.truncf %4 : vector<16x128xf32> to vector<16x128xbf16>
    %cst_8 = arith.constant dense<0.000000e+00> : vector<16x320xf32>
    %15 = tpu.matmul %14, %13, %cst_8 {dimension_numbers = #tpu.dot_dimension_numbers<[1], [0], [0], [1], [0, 0, 1, 1], [], []>} : vector<16x128xbf16>, vector<128x320xbf16>, vector<16x320xf32> -> vector<16x320xf32>
    %c0_9 = arith.constant 0 : index
    %c0_10 = arith.constant 0 : index
    %16 = vector.load %arg5[%c0_9, %c0_10] : memref<1x320xf32, #tpu.memory_space<vmem>>, vector<1x320xf32>
    %17 = vector.broadcast %16 : vector<1x320xf32> to vector<16x320xf32>
    %18 = arith.addf %15, %17 : vector<16x320xf32>
    %cst_11 = arith.constant 0.000000e+00 : f32
    %19 = vector.broadcast %cst_11 : f32 to vector<16x320xf32>
    %20 = arith.maximumf %18, %19 : vector<16x320xf32>
    %c0_12 = arith.constant 0 : index
    %c0_13 = arith.constant 0 : index
    %21 = vector.load %arg6[%c0_12, %c0_13] : memref<960x128xbf16, #tpu.memory_space<vmem>>, vector<960x128xbf16>
    %22 = arith.truncf %12 : vector<16x960xf32> to vector<16x960xbf16>
    %cst_14 = arith.constant dense<0.000000e+00> : vector<16x128xf32>
    %23 = tpu.matmul %22, %21, %cst_14 {dimension_numbers = #tpu.dot_dimension_numbers<[1], [0], [0], [1], [0, 0, 1, 1], [], []>} : vector<16x960xbf16>, vector<960x128xbf16>, vector<16x128xf32> -> vector<16x128xf32>
    %c0_15 = arith.constant 0 : index
    %c0_16 = arith.constant 0 : index
    %24 = vector.load %arg7[%c0_15, %c0_16] : memref<320x128xbf16, #tpu.memory_space<vmem>>, vector<320x128xbf16>
    %25 = arith.truncf %20 : vector<16x320xf32> to vector<16x320xbf16>
    %cst_17 = arith.constant dense<0.000000e+00> : vector<16x128xf32>
    %26 = tpu.matmul %25, %24, %cst_17 {dimension_numbers = #tpu.dot_dimension_numbers<[1], [0], [0], [1], [0, 0, 1, 1], [], []>} : vector<16x320xbf16>, vector<320x128xbf16>, vector<16x128xf32> -> vector<16x128xf32>
    %27 = arith.addf %23, %26 : vector<16x128xf32>
    %c0_18 = arith.constant 0 : index
    %c0_19 = arith.constant 0 : index
    %28 = vector.load %arg8[%c0_18, %c0_19] : memref<1x128xf32, #tpu.memory_space<vmem>>, vector<1x128xf32>
    %29 = vector.broadcast %28 : vector<1x128xf32> to vector<16x128xf32>
    %30 = arith.addf %27, %29 : vector<16x128xf32>
    %cst_20 = arith.constant 0.000000e+00 : f32
    %31 = vector.broadcast %cst_20 : f32 to vector<16x128xf32>
    %32 = arith.maximumf %30, %31 : vector<16x128xf32>
    %c0_21 = arith.constant 0 : index
    %c0_22 = arith.constant 0 : index
    %33 = vector.load %arg9[%c0_21, %c0_22] : memref<128x64xbf16, #tpu.memory_space<vmem>>, vector<128x64xbf16>
    %34 = arith.truncf %32 : vector<16x128xf32> to vector<16x128xbf16>
    %cst_23 = arith.constant dense<0.000000e+00> : vector<16x64xf32>
    %35 = tpu.matmul %34, %33, %cst_23 {dimension_numbers = #tpu.dot_dimension_numbers<[1], [0], [0], [1], [0, 0, 1, 1], [], []>} : vector<16x128xbf16>, vector<128x64xbf16>, vector<16x64xf32> -> vector<16x64xf32>
    %c0_24 = arith.constant 0 : index
    %c0_25 = arith.constant 0 : index
    %36 = vector.load %arg10[%c0_24, %c0_25] : memref<1x64xf32, #tpu.memory_space<vmem>>, vector<1x64xf32>
    %37 = vector.broadcast %36 : vector<1x64xf32> to vector<16x64xf32>
    %38 = arith.addf %35, %37 : vector<16x64xf32>
    %cst_26 = arith.constant 0.000000e+00 : f32
    %39 = vector.broadcast %cst_26 : f32 to vector<16x64xf32>
    %40 = arith.maximumf %38, %39 : vector<16x64xf32>
    %c0_27 = arith.constant 0 : index
    %c0_28 = arith.constant 0 : index
    %41 = vector.load %arg11[%c0_27, %c0_28] : memref<64x128xbf16, #tpu.memory_space<vmem>>, vector<64x128xbf16>
    %42 = arith.truncf %40 : vector<16x64xf32> to vector<16x64xbf16>
    %cst_29 = arith.constant dense<0.000000e+00> : vector<16x128xf32>
    %43 = tpu.matmul %42, %41, %cst_29 {dimension_numbers = #tpu.dot_dimension_numbers<[1], [0], [0], [1], [0, 0, 1, 1], [], []>} : vector<16x64xbf16>, vector<64x128xbf16>, vector<16x128xf32> -> vector<16x128xf32>
    %c0_30 = arith.constant 0 : index
    %c0_31 = arith.constant 0 : index
    %44 = vector.load %arg12[%c0_30, %c0_31] : memref<1x128xf32, #tpu.memory_space<vmem>>, vector<1x128xf32>
    %45 = vector.broadcast %44 : vector<1x128xf32> to vector<16x128xf32>
    %46 = arith.addf %43, %45 : vector<16x128xf32>
    %c0_32 = arith.constant 0 : index
    %c0_33 = arith.constant 0 : index
    %47 = vector.load %arg13[%c0_32, %c0_33] : memref<16x128xf32, #tpu.memory_space<vmem>>, vector<16x128xf32>
    tpu.vector_store %arg13[%c0_32, %c0_33], %46 {strides = array<i32>} : memref<16x128xf32, #tpu.memory_space<vmem>>, vector<16x128xf32>,
    return
  }
  func.func @transform_0(%arg0: i32) -> (i32, i32) {
    %c0_i32 = arith.constant 0 : i32
    %c0_i32_0 = arith.constant 0 : i32
    return %arg0, %c0_i32 : i32, i32
  }
  func.func @transform_1(%arg0: i32) -> (i32, i32) {
    %c0_i32 = arith.constant 0 : i32
    %c0_i32_0 = arith.constant 0 : i32
    %c0_i32_1 = arith.constant 0 : i32
    return %c0_i32, %c0_i32_0 : i32, i32
  }
  func.func @transform_2(%arg0: i32) -> (i32, i32) {
    %c0_i32 = arith.constant 0 : i32
    %c0_i32_0 = arith.constant 0 : i32
    %c0_i32_1 = arith.constant 0 : i32
    return %c0_i32, %c0_i32_0 : i32, i32
  }
  func.func @transform_3(%arg0: i32) -> (i32, i32) {
    %c0_i32 = arith.constant 0 : i32
    %c0_i32_0 = arith.constant 0 : i32
    %c0_i32_1 = arith.constant 0 : i32
    return %c0_i32, %c0_i32_0 : i32, i32
  }
  func.func @transform_4(%arg0: i32) -> (i32, i32) {
    %c0_i32 = arith.constant 0 : i32
    %c0_i32_0 = arith.constant 0 : i32
    %c0_i32_1 = arith.constant 0 : i32
    return %c0_i32, %c0_i32_0 : i32, i32
  }
  func.func @transform_5(%arg0: i32) -> (i32, i32) {
    %c0_i32 = arith.constant 0 : i32
    %c0_i32_0 = arith.constant 0 : i32
    %c0_i32_1 = arith.constant 0 : i32
    return %c0_i32, %c0_i32_0 : i32, i32
  }
  func.func @transform_6(%arg0: i32) -> (i32, i32) {
    %c0_i32 = arith.constant 0 : i32
    %c0_i32_0 = arith.constant 0 : i32
    %c0_i32_1 = arith.constant 0 : i32
    return %c0_i32, %c0_i32_0 : i32, i32
  }
  func.func @transform_7(%arg0: i32) -> (i32, i32) {
    %c0_i32 = arith.constant 0 : i32
    %c0_i32_0 = arith.constant 0 : i32
    %c0_i32_1 = arith.constant 0 : i32
    return %c0_i32, %c0_i32_0 : i32, i32
  }
  func.func @transform_8(%arg0: i32) -> (i32, i32) {
    %c0_i32 = arith.constant 0 : i32
    %c0_i32_0 = arith.constant 0 : i32
    %c0_i32_1 = arith.constant 0 : i32
    return %c0_i32, %c0_i32_0 : i32, i32
  }
  func.func @transform_9(%arg0: i32) -> (i32, i32) {
    %c0_i32 = arith.constant 0 : i32
    %c0_i32_0 = arith.constant 0 : i32
    %c0_i32_1 = arith.constant 0 : i32
    return %c0_i32, %c0_i32_0 : i32, i32
  }
  func.func @transform_10(%arg0: i32) -> (i32, i32) {
    %c0_i32 = arith.constant 0 : i32
    %c0_i32_0 = arith.constant 0 : i32
    %c0_i32_1 = arith.constant 0 : i32
    return %c0_i32, %c0_i32_0 : i32, i32
  }
  func.func @transform_11(%arg0: i32) -> (i32, i32) {
    %c0_i32 = arith.constant 0 : i32
    %c0_i32_0 = arith.constant 0 : i32
    %c0_i32_1 = arith.constant 0 : i32
    return %c0_i32, %c0_i32_0 : i32, i32
  }
  func.func @transform_12(%arg0: i32) -> (i32, i32) {
    %c0_i32 = arith.constant 0 : i32
    %c0_i32_0 = arith.constant 0 : i32
    return %arg0, %c0_i32 : i32, i32
  }
}

</mosaic_0001>

<llo_original>
// kernel: ntcnn_pallas.1
$region0: #{ntcnn_pallas.1}
  #allocation0 [shape = 'u32[]', space=smem, size = 0x4, offset = 0x4, fixed_abs, tag = 'smem constant byte address 0x4 - core index']
  #allocation1 [shape = 'u32[72,128]{1,0:T(1,128)}', space=vmem, size = 0x9000, scoped, tag = 'internal scratch']
  %s0 = inlined_call_operand.vmem [shape: f32[16,128], index: 0, kind: input, shape index: {}]
  %s1 = inlined_call_operand.vmem [shape: bf16[128,960], index: 1, kind: input, shape index: {}]
  %s2 = inlined_call_operand.vmem [shape: f32[1,960], index: 2, kind: input, shape index: {}]
  %s3 = inlined_call_operand.vmem [shape: bf16[128,320], index: 3, kind: input, shape index: {}]
  %s4 = inlined_call_operand.vmem [shape: f32[1,320], index: 4, kind: input, shape index: {}]
  %s5 = inlined_call_operand.vmem [shape: bf16[960,128], index: 5, kind: input, shape index: {}]
  %s6 = inlined_call_operand.vmem [shape: bf16[320,128], index: 6, kind: input, shape index: {}]
  %s7 = inlined_call_operand.vmem [shape: f32[1,128], index: 7, kind: input, shape index: {}]
  %s8 = inlined_call_operand.vmem [shape: bf16[128,64], index: 8, kind: input, shape index: {}]
  %s9 = inlined_call_operand.vmem [shape: f32[1,64], index: 9, kind: input, shape index: {}]
  %s10 = inlined_call_operand.vmem [shape: bf16[64,128], index: 10, kind: input, shape index: {}]
  %s11 = inlined_call_operand.vmem [shape: f32[1,128], index: 11, kind: input, shape index: {}]
  %s12 = inlined_call_operand.vmem [shape: f32[16,128], index: 12, kind: output, shape index: {}]
  %s13 = sld [smem:[#allocation0]]
  $region58: #{ntcnn_pallas.1} parent=0
    _
  %s15 = ssub.s32 1, %s13
  %s16 = scalar_select 0, %s15, %s13
  // Predicated region
  $region2: #{ntcnn_pallas.1} parent=0 // pred_check
    _
  $region3: #{ntcnn_pallas.1} parent=0 // pred_check_branch
    %18 = sbr.rel (0) target = $region5
  $region4: #{ntcnn_pallas.1} parent=0 // pred_region
    _
  $region5: #{ntcnn_pallas.1} parent=0 // pred_fallthru
    _
  // Predicated region
  $region6: #{ntcnn_pallas.1} parent=0 // pred_check
    _
  $region7: #{ntcnn_pallas.1} parent=0 // pred_check_branch
    %20 = sbr.rel (0) target = $region9
  $region8: #{ntcnn_pallas.1} parent=0 // pred_region
    _
  $region9: #{ntcnn_pallas.1} parent=0 // pred_fallthru
    _
  // Predicated region
  $region10: #{ntcnn_pallas.1} parent=0 // pred_check
    _
  $region11: #{ntcnn_pallas.1} parent=0 // pred_check_branch
    %22 = sbr.rel (0) target = $region13
  $region12: #{ntcnn_pallas.1} parent=0 // pred_region
    _
  $region13: #{ntcnn_pallas.1} parent=0 // pred_fallthru
    _
  // Predicated region
  $region14: #{ntcnn_pallas.1} parent=0 // pred_check
    _
  $region15: #{ntcnn_pallas.1} parent=0 // pred_check_branch
    %24 = sbr.rel (0) target = $region17
  $region16: #{ntcnn_pallas.1} parent=0 // pred_region
    _
  $region17: #{ntcnn_pallas.1} parent=0 // pred_fallthru
    _
  // Predicated region
  $region18: #{ntcnn_pallas.1} parent=0 // pred_check
    _
  $region19: #{ntcnn_pallas.1} parent=0 // pred_check_branch
    %26 = sbr.rel (0) target = $region21
  $region20: #{ntcnn_pallas.1} parent=0 // pred_region
    _
  $region21: #{ntcnn_pallas.1} parent=0 // pred_fallthru
    _
  // Predicated region
  $region22: #{ntcnn_pallas.1} parent=0 // pred_check
    _
  $region23: #{ntcnn_pallas.1} parent=0 // pred_check_branch
    %28 = sbr.rel (0) target = $region25
  $region24: #{ntcnn_pallas.1} parent=0 // pred_region
    _
  $region25: #{ntcnn_pallas.1} parent=0 // pred_fallthru
    _
  // Predicated region
  $region26: #{ntcnn_pallas.1} parent=0 // pred_check
    _
  $region27: #{ntcnn_pallas.1} parent=0 // pred_check_branch
    %30 = sbr.rel (0) target = $region29
  $region28: #{ntcnn_pallas.1} parent=0 // pred_region
    _
  $region29: #{ntcnn_pallas.1} parent=0 // pred_fallthru
    _
  // Predicated region
  $region30: #{ntcnn_pallas.1} parent=0 // pred_check
    _
  $region31: #{ntcnn_pallas.1} parent=0 // pred_check_branch
    %32 = sbr.rel (0) target = $region33
  $region32: #{ntcnn_pallas.1} parent=0 // pred_region
    _
  $region33: #{ntcnn_pallas.1} parent=0 // pred_fallthru
    _
  // Predicated region
  $region34: #{ntcnn_pallas.1} parent=0 // pred_check
    _
  $region35: #{ntcnn_pallas.1} parent=0 // pred_check_branch
    %34 = sbr.rel (0) target = $region37
  $region36: #{ntcnn_pallas.1} parent=0 // pred_region
    _
  $region37: #{ntcnn_pallas.1} parent=0 // pred_fallthru
    _
  // Predicated region
  $region38: #{ntcnn_pallas.1} parent=0 // pred_check
    _
  $region39: #{ntcnn_pallas.1} parent=0 // pred_check_branch
    %36 = sbr.rel (0) target = $region41
  $region40: #{ntcnn_pallas.1} parent=0 // pred_region
    _
  $region41: #{ntcnn_pallas.1} parent=0 // pred_fallthru
    _
  // Predicated region
  $region42: #{ntcnn_pallas.1} parent=0 // pred_check
    _
  $region43: #{ntcnn_pallas.1} parent=0 // pred_check_branch
    %38 = sbr.rel (0) target = $region45
  $region44: #{ntcnn_pallas.1} parent=0 // pred_region
    _
  $region45: #{ntcnn_pallas.1} parent=0 // pred_fallthru
    _
  // Predicated region
  $region46: #{ntcnn_pallas.1} parent=0 // pred_check
    _
  $region47: #{ntcnn_pallas.1} parent=0 // pred_check_branch
    %40 = sbr.rel (0) target = $region49
  $region48: #{ntcnn_pallas.1} parent=0 // pred_region
    _
  $region49: #{ntcnn_pallas.1} parent=0 // pred_fallthru
    _
  %v42 = vld [vmem:[%s0] sm:$0xff]
  %v43 = vld [vmem:[%s0 + $0x8] sm:$0xff]
  %44 = vrot.lane.b32.xlu0 %v42, 1
  %v45 = vpop.permute.xlu0 %44
  %46 = vrot.lane.b32.xlu0 %v43, 1
  %v47 = vpop.permute.xlu0 %46
  %48 = vrot.lane.b32.xlu0 %v42, 127
  %v49 = vpop.permute.xlu0 %48
  %50 = vrot.lane.b32.xlu0 %v43, 127
  %v51 = vpop.permute.xlu0 %50
  %v52 = vmax.f32 %v45, %v49
  %v53 = vmax.f32 %v47, %v51
  %v54 = vmax.f32 %v42, %v52
  %v55 = vmax.f32 %v43, %v53
  %v56 = vld [vmem:[%s1] sm:$0xff]
  %v57 = vld [vmem:[%s1 + $0x8] sm:$0xff]
  %v58 = vld [vmem:[%s1 + $0x10] sm:$0xff]
  %v59 = vld [vmem:[%s1 + $0x18] sm:$0xff]
  %v60 = vld [vmem:[%s1 + $0x20] sm:$0xff]
  %v61 = vld [vmem:[%s1 + $0x28] sm:$0xff]
  %v62 = vld [vmem:[%s1 + $0x30] sm:$0xff]
  %v63 = vld [vmem:[%s1 + $0x38] sm:$0xff]
  %v64 = vld [vmem:[%s1 + $0x40] sm:$0xff]
  %v65 = vld [vmem:[%s1 + $0x48] sm:$0xff]
  %v66 = vld [vmem:[%s1 + $0x50] sm:$0xff]
  %v67 = vld [vmem:[%s1 + $0x58] sm:$0xff]
  %v68 = vld [vmem:[%s1 + $0x60] sm:$0xff]
  %v69 = vld [vmem:[%s1 + $0x68] sm:$0xff]
  %v70 = vld [vmem:[%s1 + $0x70] sm:$0xff]
  %v71 = vld [vmem:[%s1 + $0x78] sm:$0xff]
  %v72 = vld [vmem:[%s1 + $0x80] sm:$0xff]
  %v73 = vld [vmem:[%s1 + $0x88] sm:$0xff]
  %v74 = vld [vmem:[%s1 + $0x90] sm:$0xff]
  %v75 = vld [vmem:[%s1 + $0x98] sm:$0xff]
  %v76 = vld [vmem:[%s1 + $0xa0] sm:$0xff]
  %v77 = vld [vmem:[%s1 + $0xa8] sm:$0xff]
  %v78 = vld [vmem:[%s1 + $0xb0] sm:$0xff]
  %v79 = vld [vmem:[%s1 + $0xb8] sm:$0xff]
  %v80 = vld [vmem:[%s1 + $0xc0] sm:$0xff]
  %v81 = vld [vmem:[%s1 + $0xc8] sm:$0xff]
  %v82 = vld [vmem:[%s1 + $0xd0] sm:$0xff]
  %v83 = vld [vmem:[%s1 + $0xd8] sm:$0xff]
  %v84 = vld [vmem:[%s1 + $0xe0] sm:$0xff]
  %v85 = vld [vmem:[%s1 + $0xe8] sm:$0xff]
  %v86 = vld [vmem:[%s1 + $0xf0] sm:$0xff]
  %v87 = vld [vmem:[%s1 + $0xf8] sm:$0xff]
  %v88 = vld [vmem:[%s1 + $0x100] sm:$0xff]
  %v89 = vld [vmem:[%s1 + $0x108] sm:$0xff]
  %v90 = vld [vmem:[%s1 + $0x110] sm:$0xff]
  %v91 = vld [vmem:[%s1 + $0x118] sm:$0xff]
  %v92 = vld [vmem:[%s1 + $0x120] sm:$0xff]
  %v93 = vld [vmem:[%s1 + $0x128] sm:$0xff]
  %v94 = vld [vmem:[%s1 + $0x130] sm:$0xff]
  %v95 = vld [vmem:[%s1 + $0x138] sm:$0xff]
  %v96 = vld [vmem:[%s1 + $0x140] sm:$0xff]
  %v97 = vld [vmem:[%s1 + $0x148] sm:$0xff]
  %v98 = vld [vmem:[%s1 + $0x150] sm:$0xff]
  %v99 = vld [vmem:[%s1 + $0x158] sm:$0xff]
  %v100 = vld [vmem:[%s1 + $0x160] sm:$0xff]
  %v101 = vld [vmem:[%s1 + $0x168] sm:$0xff]
  %v102 = vld [vmem:[%s1 + $0x170] sm:$0xff]
  %v103 = vld [vmem:[%s1 + $0x178] sm:$0xff]
  %v104 = vld [vmem:[%s1 + $0x180] sm:$0xff]
  %v105 = vld [vmem:[%s1 + $0x188] sm:$0xff]
  %v106 = vld [vmem:[%s1 + $0x190] sm:$0xff]
  %v107 = vld [vmem:[%s1 + $0x198] sm:$0xff]
  %v108 = vld [vmem:[%s1 + $0x1a0] sm:$0xff]
  %v109 = vld [vmem:[%s1 + $0x1a8] sm:$0xff]
  %v110 = vld [vmem:[%s1 + $0x1b0] sm:$0xff]
  %v111 = vld [vmem:[%s1 + $0x1b8] sm:$0xff]
  %v112 = vld [vmem:[%s1 + $0x1c0] sm:$0xff]
  %v113 = vld [vmem:[%s1 + $0x1c8] sm:$0xff]
  %v114 = vld [vmem:[%s1 + $0x1d0] sm:$0xff]
  %v115 = vld [vmem:[%s1 + $0x1d8] sm:$0xff]
  %v116 = vld [vmem:[%s1 + $0x1e0] sm:$0xff]
  %v117 = vld [vmem:[%s1 + $0x1e8] sm:$0xff]
  %v118 = vld [vmem:[%s1 + $0x1f0] sm:$0xff]
  %v119 = vld [vmem:[%s1 + $0x1f8] sm:$0xff]
  %v120 = vpack.c.bf16 %v43, %v42
  %v121 = vld [vmem:[%s2] sm:$0xff]
  %v123 = vperm.slane %v121, 0
  %v124 = vperm.slane %v121, 1
  %v125 = vperm.slane %v121, 2
  %v126 = vperm.slane %v121, 3
  %v127 = vperm.slane %v121, 4
  %v128 = vperm.slane %v121, 5
  %v129 = vperm.slane %v121, 6
  %v130 = vperm.slane %v121, 7
  %v203 = vunpack.c.l.b16 %v56
  %v204 = vunpack.c.h.b16 %v56
  %v205 = vunpack.c.l.b16 %v57
  %v206 = vunpack.c.h.b16 %v57
  %v207 = vunpack.c.l.b16 %v58
  %v208 = vunpack.c.h.b16 %v58
  %v209 = vunpack.c.l.b16 %v59
  %v210 = vunpack.c.h.b16 %v59
  %v211 = vunpack.c.l.b16 %v60
  %v212 = vunpack.c.h.b16 %v60
  %v213 = vunpack.c.l.b16 %v61
  %v214 = vunpack.c.h.b16 %v61
  %v215 = vunpack.c.l.b16 %v62
  %v216 = vunpack.c.h.b16 %v62
  %v217 = vunpack.c.l.b16 %v63
  %v218 = vunpack.c.h.b16 %v63
  %v219 = vunpack.c.l.b16 %v64
  %v220 = vunpack.c.h.b16 %v64
  %v221 = vunpack.c.l.b16 %v65
  %v222 = vunpack.c.h.b16 %v65
  %v223 = vunpack.c.l.b16 %v66
  %v224 = vunpack.c.h.b16 %v66
  %v225 = vunpack.c.l.b16 %v67
  %v226 = vunpack.c.h.b16 %v67
  %v227 = vunpack.c.l.b16 %v68
  %v228 = vunpack.c.h.b16 %v68
  %v229 = vunpack.c.l.b16 %v69
  %v230 = vunpack.c.h.b16 %v69
  %v231 = vunpack.c.l.b16 %v70
  %v232 = vunpack.c.h.b16 %v70
  %v233 = vunpack.c.l.b16 %v71
  %v234 = vunpack.c.h.b16 %v71
  %v235 = vunpack.c.l.b16 %v72
  %v236 = vunpack.c.h.b16 %v72
  %v237 = vunpack.c.l.b16 %v73
  %v238 = vunpack.c.h.b16 %v73
  %v239 = vunpack.c.l.b16 %v74
  %v240 = vunpack.c.h.b16 %v74
  %v241 = vunpack.c.l.b16 %v75
  %v242 = vunpack.c.h.b16 %v75
  %v243 = vunpack.c.l.b16 %v76
  %v244 = vunpack.c.h.b16 %v76
  %v245 = vunpack.c.l.b16 %v77
  %v246 = vunpack.c.h.b16 %v77
  %v247 = vunpack.c.l.b16 %v78
  %v248 = vunpack.c.h.b16 %v78
  %v249 = vunpack.c.l.b16 %v79
  %v250 = vunpack.c.h.b16 %v79
  %v251 = vunpack.c.l.b16 %v80
  %v252 = vunpack.c.h.b16 %v80
  %v253 = vunpack.c.l.b16 %v81
  %v254 = vunpack.c.h.b16 %v81
  %v255 = vunpack.c.l.b16 %v82
  %v256 = vunpack.c.h.b16 %v82
  %v257 = vunpack.c.l.b16 %v83
  %v258 = vunpack.c.h.b16 %v83
  %v259 = vunpack.c.l.b16 %v84
  %v260 = vunpack.c.h.b16 %v84
  %v261 = vunpack.c.l.b16 %v85
  %v262 = vunpack.c.h.b16 %v85
  %v263 = vunpack.c.l.b16 %v86
  %v264 = vunpack.c.h.b16 %v86
  %v265 = vunpack.c.l.b16 %v87
  %v266 = vunpack.c.h.b16 %v87
  %v267 = vunpack.c.l.b16 %v88
  %v268 = vunpack.c.h.b16 %v88
  %v269 = vunpack.c.l.b16 %v89
  %v270 = vunpack.c.h.b16 %v89
  %v271 = vunpack.c.l.b16 %v90
  %v272 = vunpack.c.h.b16 %v90
  %v273 = vunpack.c.l.b16 %v91
  %v274 = vunpack.c.h.b16 %v91
  %v275 = vunpack.c.l.b16 %v92
  %v276 = vunpack.c.h.b16 %v92
  %v277 = vunpack.c.l.b16 %v93
  %v278 = vunpack.c.h.b16 %v93
  %v279 = vunpack.c.l.b16 %v94
  %v280 = vunpack.c.h.b16 %v94
  %v281 = vunpack.c.l.b16 %v95
  %v282 = vunpack.c.h.b16 %v95
  %v283 = vunpack.c.l.b16 %v96
  %v284 = vunpack.c.h.b16 %v96
  %v285 = vunpack.c.l.b16 %v97
  %v286 = vunpack.c.h.b16 %v97
  %v287 = vunpack.c.l.b16 %v98
  %v288 = vunpack.c.h.b16 %v98
  %v289 = vunpack.c.l.b16 %v99
  %v290 = vunpack.c.h.b16 %v99
  %v291 = vunpack.c.l.b16 %v100
  %v292 = vunpack.c.h.b16 %v100
  %v293 = vunpack.c.l.b16 %v101
  %v294 = vunpack.c.h.b16 %v101
  %v295 = vunpack.c.l.b16 %v102
  %v296 = vunpack.c.h.b16 %v102
  %v297 = vunpack.c.l.b16 %v103
  %v298 = vunpack.c.h.b16 %v103
  %v299 = vunpack.c.l.b16 %v104
  %v300 = vunpack.c.h.b16 %v104
  %v301 = vunpack.c.l.b16 %v105
  %v302 = vunpack.c.h.b16 %v105
  %v303 = vunpack.c.l.b16 %v106
  %v304 = vunpack.c.h.b16 %v106
  %v305 = vunpack.c.l.b16 %v107
  %v306 = vunpack.c.h.b16 %v107
  %v307 = vunpack.c.l.b16 %v108
  %v308 = vunpack.c.h.b16 %v108
  %v309 = vunpack.c.l.b16 %v109
  %v310 = vunpack.c.h.b16 %v109
  %v311 = vunpack.c.l.b16 %v110
  %v312 = vunpack.c.h.b16 %v110
  %v313 = vunpack.c.l.b16 %v111
  %v314 = vunpack.c.h.b16 %v111
  %v315 = vunpack.c.l.b16 %v112
  %v316 = vunpack.c.h.b16 %v112
  %v317 = vunpack.c.l.b16 %v113
  %v318 = vunpack.c.h.b16 %v113
  %v319 = vunpack.c.l.b16 %v114
  %v320 = vunpack.c.h.b16 %v114
  %v321 = vunpack.c.l.b16 %v115
  %v322 = vunpack.c.h.b16 %v115
  %v323 = vunpack.c.l.b16 %v116
  %v324 = vunpack.c.h.b16 %v116
  %v325 = vunpack.c.l.b16 %v117
  %v326 = vunpack.c.h.b16 %v117
  %v327 = vunpack.c.l.b16 %v118
  %v328 = vunpack.c.h.b16 %v118
  %v329 = vunpack.c.l.b16 %v119
  %v330 = vunpack.c.h.b16 %v119
  %v331 = vpack.c.b16 %v211, %v203
  %v332 = vpack.c.b16 %v212, %v204
  %v333 = vpack.c.b16 %v213, %v205
  %v334 = vpack.c.b16 %v214, %v206
  %v335 = vpack.c.b16 %v215, %v207
  %v336 = vpack.c.b16 %v216, %v208
  %v337 = vpack.c.b16 %v217, %v209
  %v338 = vpack.c.b16 %v218, %v210
  %v339 = vpack.c.b16 %v227, %v219
  %v340 = vpack.c.b16 %v228, %v220
  %v341 = vpack.c.b16 %v229, %v221
  %v342 = vpack.c.b16 %v230, %v222
  %v343 = vpack.c.b16 %v231, %v223
  %v344 = vpack.c.b16 %v232, %v224
  %v345 = vpack.c.b16 %v233, %v225
  %v346 = vpack.c.b16 %v234, %v226
  %v347 = vpack.c.b16 %v243, %v235
  %v348 = vpack.c.b16 %v244, %v236
  %v349 = vpack.c.b16 %v245, %v237
  %v350 = vpack.c.b16 %v246, %v238
  %v351 = vpack.c.b16 %v247, %v239
  %v352 = vpack.c.b16 %v248, %v240
  %v353 = vpack.c.b16 %v249, %v241
  %v354 = vpack.c.b16 %v250, %v242
  %v355 = vpack.c.b16 %v259, %v251
  %v356 = vpack.c.b16 %v260, %v252
  %v357 = vpack.c.b16 %v261, %v253
  %v358 = vpack.c.b16 %v262, %v254
  %v359 = vpack.c.b16 %v263, %v255
  %v360 = vpack.c.b16 %v264, %v256
  %v361 = vpack.c.b16 %v265, %v257
  %v362 = vpack.c.b16 %v266, %v258
  %v363 = vpack.c.b16 %v275, %v267
  %v364 = vpack.c.b16 %v276, %v268
  %v365 = vpack.c.b16 %v277, %v269
  %v366 = vpack.c.b16 %v278, %v270
  %v367 = vpack.c.b16 %v279, %v271
  %v368 = vpack.c.b16 %v280, %v272
  %v369 = vpack.c.b16 %v281, %v273
  %v370 = vpack.c.b16 %v282, %v274
  %v371 = vpack.c.b16 %v291, %v283
  %v372 = vpack.c.b16 %v292, %v284
  %v373 = vpack.c.b16 %v293, %v285
  %v374 = vpack.c.b16 %v294, %v286
  %v375 = vpack.c.b16 %v295, %v287
  %v376 = vpack.c.b16 %v296, %v288
  %v377 = vpack.c.b16 %v297, %v289
  %v378 = vpack.c.b16 %v298, %v290
  %v379 = vpack.c.b16 %v307, %v299
  %v380 = vpack.c.b16 %v308, %v300
  %v381 = vpack.c.b16 %v309, %v301
  %v382 = vpack.c.b16 %v310, %v302
  %v383 = vpack.c.b16 %v311, %v303
  %v384 = vpack.c.b16 %v312, %v304
  %v385 = vpack.c.b16 %v313, %v305
  %v386 = vpack.c.b16 %v314, %v306
  %v387 = vpack.c.b16 %v323, %v315
  %v388 = vpack.c.b16 %v324, %v316
  %v389 = vpack.c.b16 %v325, %v317
  %v390 = vpack.c.b16 %v326, %v318
  %v391 = vpack.c.b16 %v327, %v319
  %v392 = vpack.c.b16 %v328, %v320
  %v393 = vpack.c.b16 %v329, %v321
  %v394 = vpack.c.b16 %v330, %v322
  %459 = vmatpush.bf16.msra.mxu0 %v387
  %460 = vmatpush.bf16.msra.mxu0 %v379
  %461 = vmatpush.bf16.msra.mxu0 %v371
  %462 = vmatpush.bf16.msra.mxu0 %v363
  %463 = vmatpush.bf16.msra.mxu0 %v355
  %464 = vmatpush.bf16.msra.mxu0 %v347
  %465 = vmatpush.bf16.msra.mxu0 %v339
  %466 = vmatpush.bf16.msra.mxu0 %v331
  %467 = vmatmul.bf16.gmra.mxu0 %v120
  %v468 = vpop.f32.mrf.mxu0
  %v469 = vadd.f32 %v123, %v468
  %v470 = vpop.f32.mrf.mxu0
  %v471 = vadd.f32 %v123, %v470
  %472 = vdwg.mxu0
  %473 = vmatpush.bf16.msra.mxu0 %v388
  %474 = vmatpush.bf16.msra.mxu0 %v380
  %475 = vmatpush.bf16.msra.mxu0 %v372
  %476 = vmatpush.bf16.msra.mxu0 %v364
  %477 = vmatpush.bf16.msra.mxu0 %v356
  %478 = vmatpush.bf16.msra.mxu0 %v348
  %479 = vmatpush.bf16.msra.mxu0 %v340
  %480 = vmatpush.bf16.msra.mxu0 %v332
  %481 = vmatmul.bf16.gmra.mxu0 %v120
  %v482 = vpop.f32.mrf.mxu0
  %v483 = vadd.f32 %v124, %v482
  %v484 = vpop.f32.mrf.mxu0
  %v485 = vadd.f32 %v124, %v484
  %486 = vdwg.mxu0
  %487 = vmatpush.bf16.msra.mxu0 %v389
  %488 = vmatpush.bf16.msra.mxu0 %v381
  %489 = vmatpush.bf16.msra.mxu0 %v373
  %490 = vmatpush.bf16.msra.mxu0 %v365
  %491 = vmatpush.bf16.msra.mxu0 %v357
  %492 = vmatpush.bf16.msra.mxu0 %v349
  %493 = vmatpush.bf16.msra.mxu0 %v341
  %494 = vmatpush.bf16.msra.mxu0 %v333
  %495 = vmatmul.bf16.gmra.mxu0 %v120
  %v496 = vpop.f32.mrf.mxu0
  %v497 = vadd.f32 %v125, %v496
  %v498 = vpop.f32.mrf.mxu0
  %v499 = vadd.f32 %v125, %v498
  %500 = vdwg.mxu0
  %501 = vmatpush.bf16.msra.mxu0 %v390
  %502 = vmatpush.bf16.msra.mxu0 %v382
  %503 = vmatpush.bf16.msra.mxu0 %v374
  %504 = vmatpush.bf16.msra.mxu0 %v366
  %505 = vmatpush.bf16.msra.mxu0 %v358
  %506 = vmatpush.bf16.msra.mxu0 %v350
  %507 = vmatpush.bf16.msra.mxu0 %v342
  %508 = vmatpush.bf16.msra.mxu0 %v334
  %509 = vmatmul.bf16.gmra.mxu0 %v120
  %v510 = vpop.f32.mrf.mxu0
  %v511 = vadd.f32 %v126, %v510
  %v512 = vpop.f32.mrf.mxu0
  %v513 = vadd.f32 %v126, %v512
  %514 = vdwg.mxu0
  %515 = vmatpush.bf16.msra.mxu0 %v391
  %516 = vmatpush.bf16.msra.mxu0 %v383
  %517 = vmatpush.bf16.msra.mxu0 %v375
  %518 = vmatpush.bf16.msra.mxu0 %v367
  %519 = vmatpush.bf16.msra.mxu0 %v359
  %520 = vmatpush.bf16.msra.mxu0 %v351
  %521 = vmatpush.bf16.msra.mxu0 %v343
  %522 = vmatpush.bf16.msra.mxu0 %v335
  %523 = vmatmul.bf16.gmra.mxu0 %v120
  %v524 = vpop.f32.mrf.mxu0
  %v525 = vadd.f32 %v127, %v524
  %v526 = vpop.f32.mrf.mxu0
  %v527 = vadd.f32 %v127, %v526
  %528 = vdwg.mxu0
  %529 = vmatpush.bf16.msra.mxu0 %v392
  %530 = vmatpush.bf16.msra.mxu0 %v384
  %531 = vmatpush.bf16.msra.mxu0 %v376
  %532 = vmatpush.bf16.msra.mxu0 %v368
  %533 = vmatpush.bf16.msra.mxu0 %v360
  %534 = vmatpush.bf16.msra.mxu0 %v352
  %535 = vmatpush.bf16.msra.mxu0 %v344
  %536 = vmatpush.bf16.msra.mxu0 %v336
  %537 = vmatmul.bf16.gmra.mxu0 %v120
  %v538 = vpop.f32.mrf.mxu0
  %v539 = vadd.f32 %v128, %v538
  %v540 = vpop.f32.mrf.mxu0
  %v541 = vadd.f32 %v128, %v540
  %542 = vdwg.mxu0
  %543 = vmatpush.bf16.msra.mxu0 %v393
  %544 = vmatpush.bf16.msra.mxu0 %v385
  %545 = vmatpush.bf16.msra.mxu0 %v377
  %546 = vmatpush.bf16.msra.mxu0 %v369
  %547 = vmatpush.bf16.msra.mxu0 %v361
  %548 = vmatpush.bf16.msra.mxu0 %v353
  %549 = vmatpush.bf16.msra.mxu0 %v345
  %550 = vmatpush.bf16.msra.mxu0 %v337
  %551 = vmatmul.bf16.gmra.mxu0 %v120
  %v552 = vpop.f32.mrf.mxu0
  %v553 = vadd.f32 %v129, %v552
  %v554 = vpop.f32.mrf.mxu0
  %v555 = vadd.f32 %v129, %v554
  %556 = vdwg.mxu0
  %557 = vmatpush.bf16.msra.mxu0 %v394
  %558 = vmatpush.bf16.msra.mxu0 %v386
  %559 = vmatpush.bf16.msra.mxu0 %v378
  %560 = vmatpush.bf16.msra.mxu0 %v370
  %561 = vmatpush.bf16.msra.mxu0 %v362
  %562 = vmatpush.bf16.msra.mxu0 %v354
  %563 = vmatpush.bf16.msra.mxu0 %v346
  %564 = vmatpush.bf16.msra.mxu0 %v338
  %565 = vmatmul.bf16.gmra.mxu0 %v120
  %v566 = vpop.f32.mrf.mxu0
  %v567 = vadd.f32 %v130, %v566
  %v568 = vpop.f32.mrf.mxu0
  %v569 = vadd.f32 %v130, %v568
  %570 = vdwg.mxu0
  %v571 = vmax.f32 %v469, 0.0
  %v572 = vmax.f32 %v483, 0.0
  %v573 = vmax.f32 %v497, 0.0
  %v574 = vmax.f32 %v511, 0.0
  %v575 = vmax.f32 %v525, 0.0
  %v576 = vmax.f32 %v539, 0.0
  %v577 = vmax.f32 %v553, 0.0
  %v578 = vmax.f32 %v567, 0.0
  %v579 = vmax.f32 %v471, 0.0
  %v580 = vmax.f32 %v485, 0.0
  %v581 = vmax.f32 %v499, 0.0
  %v582 = vmax.f32 %v513, 0.0
  %v583 = vmax.f32 %v527, 0.0
  %v584 = vmax.f32 %v541, 0.0
  %v585 = vmax.f32 %v555, 0.0
  %v586 = vmax.f32 %v569, 0.0
  %v587 = vld [vmem:[%s3] sm:$0xff]
  %v588 = vld [vmem:[%s3 + $0x8] sm:$0xf]
  %v589 = vld [vmem:[%s3 + $0xc] sm:$0xff]
  %v590 = vld [vmem:[%s3 + $0x14] sm:$0xf]
  %v591 = vld [vmem:[%s3 + $0x18] sm:$0xff]
  %v592 = vld [vmem:[%s3 + $0x20] sm:$0xf]
  %v593 = vld [vmem:[%s3 + $0x24] sm:$0xff]
  %v594 = vld [vmem:[%s3 + $0x2c] sm:$0xf]
  %v595 = vld [vmem:[%s3 + $0x30] sm:$0xff]
  %v596 = vld [vmem:[%s3 + $0x38] sm:$0xf]
  %v597 = vld [vmem:[%s3 + $0x3c] sm:$0xff]
  %v598 = vld [vmem:[%s3 + $0x44] sm:$0xf]
  %v599 = vld [vmem:[%s3 + $0x48] sm:$0xff]
  %v600 = vld [vmem:[%s3 + $0x50] sm:$0xf]
  %v601 = vld [vmem:[%s3 + $0x54] sm:$0xff]
  %v602 = vld [vmem:[%s3 + $0x5c] sm:$0xf]
  %v603 = vld [vmem:[%s3 + $0x60] sm:$0xff]
  %v604 = vld [vmem:[%s3 + $0x68] sm:$0xf]
  %v605 = vld [vmem:[%s3 + $0x6c] sm:$0xff]
  %v606 = vld [vmem:[%s3 + $0x74] sm:$0xf]
  %v607 = vld [vmem:[%s3 + $0x78] sm:$0xff]
  %v608 = vld [vmem:[%s3 + $0x80] sm:$0xf]
  %v609 = vld [vmem:[%s3 + $0x84] sm:$0xff]
  %v610 = vld [vmem:[%s3 + $0x8c] sm:$0xf]
  %v611 = vld [vmem:[%s3 + $0x90] sm:$0xff]
  %v612 = vld [vmem:[%s3 + $0x98] sm:$0xf]
  %v613 = vld [vmem:[%s3 + $0x9c] sm:$0xff]
  %v614 = vld [vmem:[%s3 + $0xa4] sm:$0xf]
  %v615 = vld [vmem:[%s3 + $0xa8] sm:$0xff]
  %v616 = vld [vmem:[%s3 + $0xb0] sm:$0xf]
  %v617 = vld [vmem:[%s3 + $0xb4] sm:$0xff]
  %v618 = vld [vmem:[%s3 + $0xbc] sm:$0xf]
  %v619 = vpack.c.bf16 %v55, %v54
  %v620 = vld [vmem:[%s4] sm:$0x7]
  %v622 = vperm.slane %v620, 0
  %v623 = vperm.slane %v620, 1
  %v624 = vperm.slane %v620, 2
  %v660 = vunpack.c.l.b16 %v587
  %v661 = vunpack.c.h.b16 %v587
  %v662 = vunpack.c.l.b16 %v588
  %v663 = vunpack.c.l.b16 %v589
  %v664 = vunpack.c.h.b16 %v589
  %v665 = vunpack.c.l.b16 %v590
  %v666 = vunpack.c.l.b16 %v591
  %v667 = vunpack.c.h.b16 %v591
  %v668 = vunpack.c.l.b16 %v592
  %v669 = vunpack.c.l.b16 %v593
  %v670 = vunpack.c.h.b16 %v593
  %v671 = vunpack.c.l.b16 %v594
  %v672 = vunpack.c.l.b16 %v595
  %v673 = vunpack.c.h.b16 %v595
  %v674 = vunpack.c.l.b16 %v596
  %v675 = vunpack.c.l.b16 %v597
  %v676 = vunpack.c.h.b16 %v597
  %v677 = vunpack.c.l.b16 %v598
  %v678 = vunpack.c.l.b16 %v599
  %v679 = vunpack.c.h.b16 %v599
  %v680 = vunpack.c.l.b16 %v600
  %v681 = vunpack.c.l.b16 %v601
  %v682 = vunpack.c.h.b16 %v601
  %v683 = vunpack.c.l.b16 %v602
  %v684 = vunpack.c.l.b16 %v603
  %v685 = vunpack.c.h.b16 %v603
  %v686 = vunpack.c.l.b16 %v604
  %v687 = vunpack.c.l.b16 %v605
  %v688 = vunpack.c.h.b16 %v605
  %v689 = vunpack.c.l.b16 %v606
  %v690 = vunpack.c.l.b16 %v607
  %v691 = vunpack.c.h.b16 %v607
  %v692 = vunpack.c.l.b16 %v608
  %v693 = vunpack.c.l.b16 %v609
  %v694 = vunpack.c.h.b16 %v609
  %v695 = vunpack.c.l.b16 %v610
  %v696 = vunpack.c.l.b16 %v611
  %v697 = vunpack.c.h.b16 %v611
  %v698 = vunpack.c.l.b16 %v612
  %v699 = vunpack.c.l.b16 %v613
  %v700 = vunpack.c.h.b16 %v613
  %v701 = vunpack.c.l.b16 %v614
  %v702 = vunpack.c.l.b16 %v615
  %v703 = vunpack.c.h.b16 %v615
  %v704 = vunpack.c.l.b16 %v616
  %v705 = vunpack.c.l.b16 %v617
  %v706 = vunpack.c.h.b16 %v617
  %v707 = vunpack.c.l.b16 %v618
  %v708 = vpack.c.b16 %v663, %v660
  %v709 = vpack.c.b16 %v664, %v661
  %v710 = vpack.c.b16 %v665, %v662
  %v711 = vpack.c.b16 %v669, %v666
  %v712 = vpack.c.b16 %v670, %v667
  %v713 = vpack.c.b16 %v671, %v668
  %v714 = vpack.c.b16 %v675, %v672
  %v715 = vpack.c.b16 %v676, %v673
  %v716 = vpack.c.b16 %v677, %v674
  %v717 = vpack.c.b16 %v681, %v678
  %v718 = vpack.c.b16 %v682, %v679
  %v719 = vpack.c.b16 %v683, %v680
  %v720 = vpack.c.b16 %v687, %v684
  %v721 = vpack.c.b16 %v688, %v685
  %v722 = vpack.c.b16 %v689, %v686
  %v723 = vpack.c.b16 %v693, %v690
  %v724 = vpack.c.b16 %v694, %v691
  %v725 = vpack.c.b16 %v695, %v692
  %v726 = vpack.c.b16 %v699, %v696
  %v727 = vpack.c.b16 %v700, %v697
  %v728 = vpack.c.b16 %v701, %v698
  %v729 = vpack.c.b16 %v705, %v702
  %v730 = vpack.c.b16 %v706, %v703
  %v731 = vpack.c.b16 %v707, %v704
  %756 = vmatpush.bf16.msra.mxu0 %v729
  %757 = vmatpush.bf16.msra.mxu0 %v726
  %758 = vmatpush.bf16.msra.mxu0 %v723
  %759 = vmatpush.bf16.msra.mxu0 %v720
  %760 = vmatpush.bf16.msra.mxu0 %v717
  %761 = vmatpush.bf16.msra.mxu0 %v714
  %762 = vmatpush.bf16.msra.mxu0 %v711
  %763 = vmatpush.bf16.msra.mxu0 %v708
  %764 = vmatmul.bf16.gmra.mxu0 %v619
  %v765 = vpop.f32.mrf.mxu0
  %v766 = vadd.f32 %v622, %v765
  %v767 = vpop.f32.mrf.mxu0
  %v768 = vadd.f32 %v622, %v767
  %769 = vdwg.mxu0
  %770 = vmatpush.bf16.msra.mxu0 %v730
  %771 = vmatpush.bf16.msra.mxu0 %v727
  %772 = vmatpush.bf16.msra.mxu0 %v724
  %773 = vmatpush.bf16.msra.mxu0 %v721
  %774 = vmatpush.bf16.msra.mxu0 %v718
  %775 = vmatpush.bf16.msra.mxu0 %v715
  %776 = vmatpush.bf16.msra.mxu0 %v712
  %777 = vmatpush.bf16.msra.mxu0 %v709
  %778 = vmatmul.bf16.gmra.mxu0 %v619
  %v779 = vpop.f32.mrf.mxu0
  %v780 = vadd.f32 %v623, %v779
  %v781 = vpop.f32.mrf.mxu0
  %v782 = vadd.f32 %v623, %v781
  %783 = vdwg.mxu0
  %784 = vmatpush.bf16.msra.mxu0 %v731
  %785 = vmatpush.bf16.msra.mxu0 %v728
  %786 = vmatpush.bf16.msra.mxu0 %v725
  %787 = vmatpush.bf16.msra.mxu0 %v722
  %788 = vmatpush.bf16.msra.mxu0 %v719
  %789 = vmatpush.bf16.msra.mxu0 %v716
  %790 = vmatpush.bf16.msra.mxu0 %v713
  %791 = vmatpush.bf16.msra.mxu0 %v710
  %792 = vmatmul.bf16.gmra.mxu0 %v619
  %v793 = vpop.f32.mrf.mxu0
  %v794 = vadd.f32 %v624, %v793
  %v795 = vpop.f32.mrf.mxu0
  %v796 = vadd.f32 %v624, %v795
  %797 = vdwg.mxu0
  %v798 = vmax.f32 %v766, 0.0
  %v799 = vmax.f32 %v780, 0.0
  %v800 = vmax.f32 %v794, 0.0
  %v801 = vmax.f32 %v768, 0.0
  %v802 = vmax.f32 %v782, 0.0
  %v803 = vmax.f32 %v796, 0.0
  %v804 = vld [vmem:[%s5] sm:$0xf]
  %v805 = vld [vmem:[%s5 + $0x4] sm:$0xf]
  %v806 = vld [vmem:[%s5 + $0x8] sm:$0xf]
  %v807 = vld [vmem:[%s5 + $0xc] sm:$0xf]
  %v808 = vld [vmem:[%s5 + $0x10] sm:$0xf]
  %v809 = vld [vmem:[%s5 + $0x14] sm:$0xf]
  %v810 = vld [vmem:[%s5 + $0x18] sm:$0xf]
  %v811 = vld [vmem:[%s5 + $0x1c] sm:$0xf]
  %v812 = vld [vmem:[%s5 + $0x20] sm:$0xf]
  %v813 = vld [vmem:[%s5 + $0x24] sm:$0xf]
  %v814 = vld [vmem:[%s5 + $0x28] sm:$0xf]
  %v815 = vld [vmem:[%s5 + $0x2c] sm:$0xf]
  %v816 = vld [vmem:[%s5 + $0x30] sm:$0xf]
  %v817 = vld [vmem:[%s5 + $0x34] sm:$0xf]
  %v818 = vld [vmem:[%s5 + $0x38] sm:$0xf]
  %v819 = vld [vmem:[%s5 + $0x3c] sm:$0xf]
  %v820 = vld [vmem:[%s5 + $0x40] sm:$0xf]
  %v821 = vld [vmem:[%s5 + $0x44] sm:$0xf]
  %v822 = vld [vmem:[%s5 + $0x48] sm:$0xf]
  %v823 = vld [vmem:[%s5 + $0x4c] sm:$0xf]
  %v824 = vld [vmem:[%s5 + $0x50] sm:$0xf]
  %v825 = vld [vmem:[%s5 + $0x54] sm:$0xf]
  %v826 = vld [vmem:[%s5 + $0x58] sm:$0xf]
  %v827 = vld [vmem:[%s5 + $0x5c] sm:$0xf]
  %v828 = vld [vmem:[%s5 + $0x60] sm:$0xf]
  %v829 = vld [vmem:[%s5 + $0x64] sm:$0xf]
  %v830 = vld [vmem:[%s5 + $0x68] sm:$0xf]
  %v831 = vld [vmem:[%s5 + $0x6c] sm:$0xf]
  %v832 = vld [vmem:[%s5 + $0x70] sm:$0xf]
  %v833 = vld [vmem:[%s5 + $0x74] sm:$0xf]
  %v834 = vld [vmem:[%s5 + $0x78] sm:$0xf]
  %v835 = vld [vmem:[%s5 + $0x7c] sm:$0xf]
  %v836 = vld [vmem:[%s5 + $0x80] sm:$0xf]
  %v837 = vld [vmem:[%s5 + $0x84] sm:$0xf]
  %v838 = vld [vmem:[%s5 + $0x88] sm:$0xf]
  %v839 = vld [vmem:[%s5 + $0x8c] sm:$0xf]
  %v840 = vld [vmem:[%s5 + $0x90] sm:$0xf]
  %v841 = vld [vmem:[%s5 + $0x94] sm:$0xf]
  %v842 = vld [vmem:[%s5 + $0x98] sm:$0xf]
  %v843 = vld [vmem:[%s5 + $0x9c] sm:$0xf]
  %v844 = vld [vmem:[%s5 + $0xa0] sm:$0xf]
  %v845 = vld [vmem:[%s5 + $0xa4] sm:$0xf]
  %v846 = vld [vmem:[%s5 + $0xa8] sm:$0xf]
  %v847 = vld [vmem:[%s5 + $0xac] sm:$0xf]
  %v848 = vld [vmem:[%s5 + $0xb0] sm:$0xf]
  %v849 = vld [vmem:[%s5 + $0xb4] sm:$0xf]
  %v850 = vld [vmem:[%s5 + $0xb8] sm:$0xf]
  %v851 = vld [vmem:[%s5 + $0xbc] sm:$0xf]
  %v852 = vld [vmem:[%s5 + $0xc0] sm:$0xf]
  %v853 = vld [vmem:[%s5 + $0xc4] sm:$0xf]
  %v854 = vld [vmem:[%s5 + $0xc8] sm:$0xf]
  %v855 = vld [vmem:[%s5 + $0xcc] sm:$0xf]
  %v856 = vld [vmem:[%s5 + $0xd0] sm:$0xf]
  %v857 = vld [vmem:[%s5 + $0xd4] sm:$0xf]
  %v858 = vld [vmem:[%s5 + $0xd8] sm:$0xf]
  %v859 = vld [vmem:[%s5 + $0xdc] sm:$0xf]
  %v860 = vld [vmem:[%s5 + $0xe0] sm:$0xf]
  %v861 = vld [vmem:[%s5 + $0xe4] sm:$0xf]
  %v862 = vld [vmem:[%s5 + $0xe8] sm:$0xf]
  %v863 = vld [vmem:[%s5 + $0xec] sm:$0xf]
  %v864 = vld [vmem:[%s5 + $0xf0] sm:$0xf]
  %v865 = vld [vmem:[%s5 + $0xf4] sm:$0xf]
  %v866 = vld [vmem:[%s5 + $0xf8] sm:$0xf]
  %v867 = vld [vmem:[%s5 + $0xfc] sm:$0xf]
  %v868 = vld [vmem:[%s5 + $0x100] sm:$0xf]
  %v869 = vld [vmem:[%s5 + $0x104] sm:$0xf]
  %v870 = vld [vmem:[%s5 + $0x108] sm:$0xf]
  %v871 = vld [vmem:[%s5 + $0x10c] sm:$0xf]
  %v872 = vld [vmem:[%s5 + $0x110] sm:$0xf]
  %v873 = vld [vmem:[%s5 + $0x114] sm:$0xf]
  %v874 = vld [vmem:[%s5 + $0x118] sm:$0xf]
  %v875 = vld [vmem:[%s5 + $0x11c] sm:$0xf]
  %v876 = vld [vmem:[%s5 + $0x120] sm:$0xf]
  %v877 = vld [vmem:[%s5 + $0x124] sm:$0xf]
  %v878 = vld [vmem:[%s5 + $0x128] sm:$0xf]
  %v879 = vld [vmem:[%s5 + $0x12c] sm:$0xf]
  %v880 = vld [vmem:[%s5 + $0x130] sm:$0xf]
  %v881 = vld [vmem:[%s5 + $0x134] sm:$0xf]
  %v882 = vld [vmem:[%s5 + $0x138] sm:$0xf]
  %v883 = vld [vmem:[%s5 + $0x13c] sm:$0xf]
  %v884 = vld [vmem:[%s5 + $0x140] sm:$0xf]
  %v885 = vld [vmem:[%s5 + $0x144] sm:$0xf]
  %v886 = vld [vmem:[%s5 + $0x148] sm:$0xf]
  %v887 = vld [vmem:[%s5 + $0x14c] sm:$0xf]
  %v888 = vld [vmem:[%s5 + $0x150] sm:$0xf]
  %v889 = vld [vmem:[%s5 + $0x154] sm:$0xf]
  %v890 = vld [vmem:[%s5 + $0x158] sm:$0xf]
  %v891 = vld [vmem:[%s5 + $0x15c] sm:$0xf]
  %v892 = vld [vmem:[%s5 + $0x160] sm:$0xf]
  %v893 = vld [vmem:[%s5 + $0x164] sm:$0xf]
  %v894 = vld [vmem:[%s5 + $0x168] sm:$0xf]
  %v895 = vld [vmem:[%s5 + $0x16c] sm:$0xf]
  %v896 = vld [vmem:[%s5 + $0x170] sm:$0xf]
  %v897 = vld [vmem:[%s5 + $0x174] sm:$0xf]
  %v898 = vld [vmem:[%s5 + $0x178] sm:$0xf]
  %v899 = vld [vmem:[%s5 + $0x17c] sm:$0xf]
  %v900 = vld [vmem:[%s5 + $0x180] sm:$0xf]
  %v901 = vld [vmem:[%s5 + $0x184] sm:$0xf]
  %v902 = vld [vmem:[%s5 + $0x188] sm:$0xf]
  %v903 = vld [vmem:[%s5 + $0x18c] sm:$0xf]
  %v904 = vld [vmem:[%s5 + $0x190] sm:$0xf]
  %v905 = vld [vmem:[%s5 + $0x194] sm:$0xf]
  %v906 = vld [vmem:[%s5 + $0x198] sm:$0xf]
  %v907 = vld [vmem:[%s5 + $0x19c] sm:$0xf]
  %v908 = vld [vmem:[%s5 + $0x1a0] sm:$0xf]
  %v909 = vld [vmem:[%s5 + $0x1a4] sm:$0xf]
  %v910 = vld [vmem:[%s5 + $0x1a8] sm:$0xf]
  %v911 = vld [vmem:[%s5 + $0x1ac] sm:$0xf]
  %v912 = vld [vmem:[%s5 + $0x1b0] sm:$0xf]
  %v913 = vld [vmem:[%s5 + $0x1b4] sm:$0xf]
  %v914 = vld [vmem:[%s5 + $0x1b8] sm:$0xf]
  %v915 = vld [vmem:[%s5 + $0x1bc] sm:$0xf]
  %v916 = vld [vmem:[%s5 + $0x1c0] sm:$0xf]
  %v917 = vld [vmem:[%s5 + $0x1c4] sm:$0xf]
  %v918 = vld [vmem:[%s5 + $0x1c8] sm:$0xf]
  %v919 = vld [vmem:[%s5 + $0x1cc] sm:$0xf]
  %v920 = vld [vmem:[%s5 + $0x1d0] sm:$0xf]
  %v921 = vld [vmem:[%s5 + $0x1d4] sm:$0xf]
  %v922 = vld [vmem:[%s5 + $0x1d8] sm:$0xf]
  %v923 = vld [vmem:[%s5 + $0x1dc] sm:$0xf]
  %v924 = vpack.c.bf16 %v579, %v571
  %v925 = vpack.c.bf16 %v580, %v572
  %v926 = vpack.c.bf16 %v581, %v573
  %v927 = vpack.c.bf16 %v582, %v574
  %v928 = vpack.c.bf16 %v583, %v575
  %v929 = vpack.c.bf16 %v584, %v576
  %v930 = vpack.c.bf16 %v585, %v577
  %v931 = vpack.c.bf16 %v586, %v578
  %v932 = vld [vmem:[%s6] sm:$0xf]
  %v933 = vld [vmem:[%s6 + $0x4] sm:$0xf]
  %v934 = vld [vmem:[%s6 + $0x8] sm:$0xf]
  %v935 = vld [vmem:[%s6 + $0xc] sm:$0xf]
  %v936 = vld [vmem:[%s6 + $0x10] sm:$0xf]
  %v937 = vld [vmem:[%s6 + $0x14] sm:$0xf]
  %v938 = vld [vmem:[%s6 + $0x18] sm:$0xf]
  %v939 = vld [vmem:[%s6 + $0x1c] sm:$0xf]
  %v940 = vld [vmem:[%s6 + $0x20] sm:$0xf]
  %v941 = vld [vmem:[%s6 + $0x24] sm:$0xf]
  %v942 = vld [vmem:[%s6 + $0x28] sm:$0xf]
  %v943 = vld [vmem:[%s6 + $0x2c] sm:$0xf]
  %v944 = vld [vmem:[%s6 + $0x30] sm:$0xf]
  %v945 = vld [vmem:[%s6 + $0x34] sm:$0xf]
  %v946 = vld [vmem:[%s6 + $0x38] sm:$0xf]
  %v947 = vld [vmem:[%s6 + $0x3c] sm:$0xf]
  %v948 = vld [vmem:[%s6 + $0x40] sm:$0xf]
  %v949 = vld [vmem:[%s6 + $0x44] sm:$0xf]
  %v950 = vld [vmem:[%s6 + $0x48] sm:$0xf]
  %v951 = vld [vmem:[%s6 + $0x4c] sm:$0xf]
  %v952 = vld [vmem:[%s6 + $0x50] sm:$0xf]
  %v953 = vld [vmem:[%s6 + $0x54] sm:$0xf]
  %v954 = vld [vmem:[%s6 + $0x58] sm:$0xf]
  %v955 = vld [vmem:[%s6 + $0x5c] sm:$0xf]
  %v956 = vld [vmem:[%s6 + $0x60] sm:$0xf]
  %v957 = vld [vmem:[%s6 + $0x64] sm:$0xf]
  %v958 = vld [vmem:[%s6 + $0x68] sm:$0xf]
  %v959 = vld [vmem:[%s6 + $0x6c] sm:$0xf]
  %v960 = vld [vmem:[%s6 + $0x70] sm:$0xf]
  %v961 = vld [vmem:[%s6 + $0x74] sm:$0xf]
  %v962 = vld [vmem:[%s6 + $0x78] sm:$0xf]
  %v963 = vld [vmem:[%s6 + $0x7c] sm:$0xf]
  %v964 = vld [vmem:[%s6 + $0x80] sm:$0xf]
  %v965 = vld [vmem:[%s6 + $0x84] sm:$0xf]
  %v966 = vld [vmem:[%s6 + $0x88] sm:$0xf]
  %v967 = vld [vmem:[%s6 + $0x8c] sm:$0xf]
  %v968 = vld [vmem:[%s6 + $0x90] sm:$0xf]
  %v969 = vld [vmem:[%s6 + $0x94] sm:$0xf]
  %v970 = vld [vmem:[%s6 + $0x98] sm:$0xf]
  %v971 = vld [vmem:[%s6 + $0x9c] sm:$0xf]
  %v972 = vpack.c.bf16 %v801, %v798
  %v973 = vpack.c.bf16 %v802, %v799
  %v974 = vpack.c.bf16 %v803, %v800
  %v1015 = vunpack.c.l.b16 %v932
  %v1016 = vunpack.c.l.b16 %v933
  %v1017 = vunpack.c.l.b16 %v934
  %v1018 = vunpack.c.l.b16 %v935
  %v1019 = vunpack.c.l.b16 %v936
  %v1020 = vunpack.c.l.b16 %v937
  %v1021 = vunpack.c.l.b16 %v938
  %v1022 = vunpack.c.l.b16 %v939
  %v1023 = vunpack.c.l.b16 %v940
  %v1024 = vunpack.c.l.b16 %v941
  %v1025 = vunpack.c.l.b16 %v942
  %v1026 = vunpack.c.l.b16 %v943
  %v1027 = vunpack.c.l.b16 %v944
  %v1028 = vunpack.c.l.b16 %v945
  %v1029 = vunpack.c.l.b16 %v946
  %v1030 = vunpack.c.l.b16 %v947
  %v1031 = vunpack.c.l.b16 %v948
  %v1032 = vunpack.c.l.b16 %v949
  %v1033 = vunpack.c.l.b16 %v950
  %v1034 = vunpack.c.l.b16 %v951
  %v1035 = vunpack.c.l.b16 %v952
  %v1036 = vunpack.c.l.b16 %v953
  %v1037 = vunpack.c.l.b16 %v954
  %v1038 = vunpack.c.l.b16 %v955
  %v1039 = vunpack.c.l.b16 %v956
  %v1040 = vunpack.c.l.b16 %v957
  %v1041 = vunpack.c.l.b16 %v958
  %v1042 = vunpack.c.l.b16 %v959
  %v1043 = vunpack.c.l.b16 %v960
  %v1044 = vunpack.c.l.b16 %v961
  %v1045 = vunpack.c.l.b16 %v962
  %v1046 = vunpack.c.l.b16 %v963
  %v1047 = vunpack.c.l.b16 %v964
  %v1048 = vunpack.c.l.b16 %v965
  %v1049 = vunpack.c.l.b16 %v966
  %v1050 = vunpack.c.l.b16 %v967
  %v1051 = vunpack.c.l.b16 %v968
  %v1052 = vunpack.c.l.b16 %v969
  %v1053 = vunpack.c.l.b16 %v970
  %v1054 = vunpack.c.l.b16 %v971
  %v1055 = vpack.c.b16 %v1016, %v1015
  %v1056 = vpack.c.b16 %v1018, %v1017
  %v1057 = vpack.c.b16 %v1020, %v1019
  %v1058 = vpack.c.b16 %v1022, %v1021
  %v1059 = vpack.c.b16 %v1024, %v1023
  %v1060 = vpack.c.b16 %v1026, %v1025
  %v1061 = vpack.c.b16 %v1028, %v1027
  %v1062 = vpack.c.b16 %v1030, %v1029
  %v1063 = vpack.c.b16 %v1032, %v1031
  %v1064 = vpack.c.b16 %v1034, %v1033
  %v1065 = vpack.c.b16 %v1036, %v1035
  %v1066 = vpack.c.b16 %v1038, %v1037
  %v1067 = vpack.c.b16 %v1040, %v1039
  %v1068 = vpack.c.b16 %v1042, %v1041
  %v1069 = vpack.c.b16 %v1044, %v1043
  %v1070 = vpack.c.b16 %v1046, %v1045
  %v1071 = vpack.c.b16 %v1048, %v1047
  %v1072 = vpack.c.b16 %v1050, %v1049
  %v1073 = vpack.c.b16 %v1052, %v1051
  %v1074 = vpack.c.b16 %v1054, %v1053
  %vm1095 = vcmask 523264
  %v1097 = vsel %vm1095, %v974, 0
  %1099 = vmatpush.bf16.msra.mxu0 %v1062
  %1100 = vmatpush.bf16.msra.mxu0 %v1061
  %1101 = vmatpush.bf16.msra.mxu0 %v1060
  %1102 = vmatpush.bf16.msra.mxu0 %v1059
  %1103 = vmatpush.bf16.msra.mxu0 %v1058
  %1104 = vmatpush.bf16.msra.mxu0 %v1057
  %1105 = vmatpush.bf16.msra.mxu0 %v1056
  %1106 = vmatpush.bf16.msra.mxu0 %v1055
  %1107 = vmatmul.bf16.gmra.mxu0 %v972
  %v1108 = vpop.f32.mrf.mxu0
  %v1109 = vadd.f32 0.0, %v1108
  %v1110 = vpop.f32.mrf.mxu0
  %v1111 = vadd.f32 0.0, %v1110
  %1112 = vdwg.mxu0
  %1113 = vmatpush.bf16.msra.mxu0 %v1070
  %1114 = vmatpush.bf16.msra.mxu0 %v1069
  %1115 = vmatpush.bf16.msra.mxu0 %v1068
  %1116 = vmatpush.bf16.msra.mxu0 %v1067
  %1117 = vmatpush.bf16.msra.mxu0 %v1066
  %1118 = vmatpush.bf16.msra.mxu0 %v1065
  %1119 = vmatpush.bf16.msra.mxu0 %v1064
  %1120 = vmatpush.bf16.msra.mxu0 %v1063
  %1121 = vmatmul.bf16.gmra.mxu0 %v973
  %v1122 = vpop.f32.mrf.mxu0
  %v1123 = vadd.f32 %v1109, %v1122
  %v1124 = vpop.f32.mrf.mxu0
  %v1125 = vadd.f32 %v1111, %v1124
  %1126 = vdwg.mxu0
  %1127 = vmatpush.bf16.msra.mxu0 0
  %1128 = vmatpush.bf16.msra.mxu0 0
  %1129 = vmatpush.bf16.msra.mxu0 0
  %1130 = vmatpush.bf16.msra.mxu0 0
  %1131 = vmatpush.bf16.msra.mxu0 %v1074
  %1132 = vmatpush.bf16.msra.mxu0 %v1073
  %1133 = vmatpush.bf16.msra.mxu0 %v1072
  %1134 = vmatpush.bf16.msra.mxu0 %v1071
  %1135 = vmatmul.bf16.gmra.mxu0 %v1097
  %v1136 = vpop.f32.mrf.mxu0
  %v1137 = vadd.f32 %v1123, %v1136
  %v1138 = vpop.f32.mrf.mxu0
  %v1139 = vadd.f32 %v1125, %v1138
  %1140 = vdwg.mxu0
  %v1261 = vunpack.c.l.b16 %v804
  %v1262 = vunpack.c.l.b16 %v805
  %v1263 = vunpack.c.l.b16 %v806
  %v1264 = vunpack.c.l.b16 %v807
  %v1265 = vunpack.c.l.b16 %v808
  %v1266 = vunpack.c.l.b16 %v809
  %v1267 = vunpack.c.l.b16 %v810
  %v1268 = vunpack.c.l.b16 %v811
  %v1269 = vunpack.c.l.b16 %v812
  %v1270 = vunpack.c.l.b16 %v813
  %v1271 = vunpack.c.l.b16 %v814
  %v1272 = vunpack.c.l.b16 %v815
  %v1273 = vunpack.c.l.b16 %v816
  %v1274 = vunpack.c.l.b16 %v817
  %v1275 = vunpack.c.l.b16 %v818
  %v1276 = vunpack.c.l.b16 %v819
  %v1277 = vunpack.c.l.b16 %v820
  %v1278 = vunpack.c.l.b16 %v821
  %v1279 = vunpack.c.l.b16 %v822
  %v1280 = vunpack.c.l.b16 %v823
  %v1281 = vunpack.c.l.b16 %v824
  %v1282 = vunpack.c.l.b16 %v825
  %v1283 = vunpack.c.l.b16 %v826
  %v1284 = vunpack.c.l.b16 %v827
  %v1285 = vunpack.c.l.b16 %v828
  %v1286 = vunpack.c.l.b16 %v829
  %v1287 = vunpack.c.l.b16 %v830
  %v1288 = vunpack.c.l.b16 %v831
  %v1289 = vunpack.c.l.b16 %v832
  %v1290 = vunpack.c.l.b16 %v833
  %v1291 = vunpack.c.l.b16 %v834
  %v1292 = vunpack.c.l.b16 %v835
  %v1293 = vunpack.c.l.b16 %v836
  %v1294 = vunpack.c.l.b16 %v837
  %v1295 = vunpack.c.l.b16 %v838
  %v1296 = vunpack.c.l.b16 %v839
  %v1297 = vunpack.c.l.b16 %v840
  %v1298 = vunpack.c.l.b16 %v841
  %v1299 = vunpack.c.l.b16 %v842
  %v1300 = vunpack.c.l.b16 %v843
  %v1301 = vunpack.c.l.b16 %v844
  %v1302 = vunpack.c.l.b16 %v845
  %v1303 = vunpack.c.l.b16 %v846
  %v1304 = vunpack.c.l.b16 %v847
  %v1305 = vunpack.c.l.b16 %v848
  %v1306 = vunpack.c.l.b16 %v849
  %v1307 = vunpack.c.l.b16 %v850
  %v1308 = vunpack.c.l.b16 %v851
  %v1309 = vunpack.c.l.b16 %v852
  %v1310 = vunpack.c.l.b16 %v853
  %v1311 = vunpack.c.l.b16 %v854
  %v1312 = vunpack.c.l.b16 %v855
  %v1313 = vunpack.c.l.b16 %v856
  %v1314 = vunpack.c.l.b16 %v857
  %v1315 = vunpack.c.l.b16 %v858
  %v1316 = vunpack.c.l.b16 %v859
  %v1317 = vunpack.c.l.b16 %v860
  %v1318 = vunpack.c.l.b16 %v861
  %v1319 = vunpack.c.l.b16 %v862
  %v1320 = vunpack.c.l.b16 %v863
  %v1321 = vunpack.c.l.b16 %v864
  %v1322 = vunpack.c.l.b16 %v865
  %v1323 = vunpack.c.l.b16 %v866
  %v1324 = vunpack.c.l.b16 %v867
  %v1325 = vunpack.c.l.b16 %v868
  %v1326 = vunpack.c.l.b16 %v869
  %v1327 = vunpack.c.l.b16 %v870
  %v1328 = vunpack.c.l.b16 %v871
  %v1329 = vunpack.c.l.b16 %v872
  %v1330 = vunpack.c.l.b16 %v873
  %v1331 = vunpack.c.l.b16 %v874
  %v1332 = vunpack.c.l.b16 %v875
  %v1333 = vunpack.c.l.b16 %v876
  %v1334 = vunpack.c.l.b16 %v877
  %v1335 = vunpack.c.l.b16 %v878
  %v1336 = vunpack.c.l.b16 %v879
  %v1337 = vunpack.c.l.b16 %v880
  %v1338 = vunpack.c.l.b16 %v881
  %v1339 = vunpack.c.l.b16 %v882
  %v1340 = vunpack.c.l.b16 %v883
  %v1341 = vunpack.c.l.b16 %v884
  %v1342 = vunpack.c.l.b16 %v885
  %v1343 = vunpack.c.l.b16 %v886
  %v1344 = vunpack.c.l.b16 %v887
  %v1345 = vunpack.c.l.b16 %v888
  %v1346 = vunpack.c.l.b16 %v889
  %v1347 = vunpack.c.l.b16 %v890
  %v1348 = vunpack.c.l.b16 %v891
  %v1349 = vunpack.c.l.b16 %v892
  %v1350 = vunpack.c.l.b16 %v893
  %v1351 = vunpack.c.l.b16 %v894
  %v1352 = vunpack.c.l.b16 %v895
  %v1353 = vunpack.c.l.b16 %v896
  %v1354 = vunpack.c.l.b16 %v897
  %v1355 = vunpack.c.l.b16 %v898
  %v1356 = vunpack.c.l.b16 %v899
  %v1357 = vunpack.c.l.b16 %v900
  %v1358 = vunpack.c.l.b16 %v901
  %v1359 = vunpack.c.l.b16 %v902
  %v1360 = vunpack.c.l.b16 %v903
  %v1361 = vunpack.c.l.b16 %v904
  %v1362 = vunpack.c.l.b16 %v905
  %v1363 = vunpack.c.l.b16 %v906
  %v1364 = vunpack.c.l.b16 %v907
  %v1365 = vunpack.c.l.b16 %v908
  %v1366 = vunpack.c.l.b16 %v909
  %v1367 = vunpack.c.l.b16 %v910
  %v1368 = vunpack.c.l.b16 %v911
  %v1369 = vunpack.c.l.b16 %v912
  %v1370 = vunpack.c.l.b16 %v913
  %v1371 = vunpack.c.l.b16 %v914
  %v1372 = vunpack.c.l.b16 %v915
  %v1373 = vunpack.c.l.b16 %v916
  %v1374 = vunpack.c.l.b16 %v917
  %v1375 = vunpack.c.l.b16 %v918
  %v1376 = vunpack.c.l.b16 %v919
  %v1377 = vunpack.c.l.b16 %v920
  %v1378 = vunpack.c.l.b16 %v921
  %v1379 = vunpack.c.l.b16 %v922
  %v1380 = vunpack.c.l.b16 %v923
  %v1381 = vpack.c.b16 %v1262, %v1261
  %v1382 = vpack.c.b16 %v1264, %v1263
  %v1383 = vpack.c.b16 %v1266, %v1265
  %v1384 = vpack.c.b16 %v1268, %v1267
  %v1385 = vpack.c.b16 %v1270, %v1269
  %v1386 = vpack.c.b16 %v1272, %v1271
  %v1387 = vpack.c.b16 %v1274, %v1273
  %v1388 = vpack.c.b16 %v1276, %v1275
  %v1389 = vpack.c.b16 %v1278, %v1277
  %v1390 = vpack.c.b16 %v1280, %v1279
  %v1391 = vpack.c.b16 %v1282, %v1281
  %v1392 = vpack.c.b16 %v1284, %v1283
  %v1393 = vpack.c.b16 %v1286, %v1285
  %v1394 = vpack.c.b16 %v1288, %v1287
  %v1395 = vpack.c.b16 %v1290, %v1289
  %v1396 = vpack.c.b16 %v1292, %v1291
  %v1397 = vpack.c.b16 %v1294, %v1293
  %v1398 = vpack.c.b16 %v1296, %v1295
  %v1399 = vpack.c.b16 %v1298, %v1297
  %v1400 = vpack.c.b16 %v1300, %v1299
  %v1401 = vpack.c.b16 %v1302, %v1301
  %v1402 = vpack.c.b16 %v1304, %v1303
  %v1403 = vpack.c.b16 %v1306, %v1305
  %v1404 = vpack.c.b16 %v1308, %v1307
  %v1405 = vpack.c.b16 %v1310, %v1309
  %v1406 = vpack.c.b16 %v1312, %v1311
  %v1407 = vpack.c.b16 %v1314, %v1313
  %v1408 = vpack.c.b16 %v1316, %v1315
  %v1409 = vpack.c.b16 %v1318, %v1317
  %v1410 = vpack.c.b16 %v1320, %v1319
  %v1411 = vpack.c.b16 %v1322, %v1321
  %v1412 = vpack.c.b16 %v1324, %v1323
  %v1413 = vpack.c.b16 %v1326, %v1325
  %v1414 = vpack.c.b16 %v1328, %v1327
  %v1415 = vpack.c.b16 %v1330, %v1329
  %v1416 = vpack.c.b16 %v1332, %v1331
  %v1417 = vpack.c.b16 %v1334, %v1333
  %v1418 = vpack.c.b16 %v1336, %v1335
  %v1419 = vpack.c.b16 %v1338, %v1337
  %v1420 = vpack.c.b16 %v1340, %v1339
  %v1421 = vpack.c.b16 %v1342, %v1341
  %v1422 = vpack.c.b16 %v1344, %v1343
  %v1423 = vpack.c.b16 %v1346, %v1345
  %v1424 = vpack.c.b16 %v1348, %v1347
  %v1425 = vpack.c.b16 %v1350, %v1349
  %v1426 = vpack.c.b16 %v1352, %v1351
  %v1427 = vpack.c.b16 %v1354, %v1353
  %v1428 = vpack.c.b16 %v1356, %v1355
  %v1429 = vpack.c.b16 %v1358, %v1357
  %v1430 = vpack.c.b16 %v1360, %v1359
  %v1431 = vpack.c.b16 %v1362, %v1361
  %v1432 = vpack.c.b16 %v1364, %v1363
  %v1433 = vpack.c.b16 %v1366, %v1365
  %v1434 = vpack.c.b16 %v1368, %v1367
  %v1435 = vpack.c.b16 %v1370, %v1369
  %v1436 = vpack.c.b16 %v1372, %v1371
  %v1437 = vpack.c.b16 %v1374, %v1373
  %v1438 = vpack.c.b16 %v1376, %v1375
  %v1439 = vpack.c.b16 %v1378, %v1377
  %v1440 = vpack.c.b16 %v1380, %v1379
  %v1502 = vsel %vm1095, %v931, 0
  %1504 = vmatpush.bf16.msra.mxu0 %v1388
  %1505 = vmatpush.bf16.msra.mxu0 %v1387
  %1506 = vmatpush.bf16.msra.mxu0 %v1386
  %1507 = vmatpush.bf16.msra.mxu0 %v1385
  %1508 = vmatpush.bf16.msra.mxu0 %v1384
  %1509 = vmatpush.bf16.msra.mxu0 %v1383
  %1510 = vmatpush.bf16.msra.mxu0 %v1382
  %1511 = vmatpush.bf16.msra.mxu0 %v1381
  %1512 = vmatmul.bf16.gmra.mxu0 %v924
  %v1513 = vpop.f32.mrf.mxu0
  %v1514 = vadd.f32 %v1137, %v1513
  %v1515 = vpop.f32.mrf.mxu0
  %v1516 = vadd.f32 %v1139, %v1515
  %1517 = vdwg.mxu0
  %1518 = vmatpush.bf16.msra.mxu0 %v1396
  %1519 = vmatpush.bf16.msra.mxu0 %v1395
  %1520 = vmatpush.bf16.msra.mxu0 %v1394
  %1521 = vmatpush.bf16.msra.mxu0 %v1393
  %1522 = vmatpush.bf16.msra.mxu0 %v1392
  %1523 = vmatpush.bf16.msra.mxu0 %v1391
  %1524 = vmatpush.bf16.msra.mxu0 %v1390
  %1525 = vmatpush.bf16.msra.mxu0 %v1389
  %1526 = vmatmul.bf16.gmra.mxu0 %v925
  %v1527 = vpop.f32.mrf.mxu0
  %v1528 = vadd.f32 %v1514, %v1527
  %v1529 = vpop.f32.mrf.mxu0
  %v1530 = vadd.f32 %v1516, %v1529
  %1531 = vdwg.mxu0
  %1532 = vmatpush.bf16.msra.mxu0 %v1404
  %1533 = vmatpush.bf16.msra.mxu0 %v1403
  %1534 = vmatpush.bf16.msra.mxu0 %v1402
  %1535 = vmatpush.bf16.msra.mxu0 %v1401
  %1536 = vmatpush.bf16.msra.mxu0 %v1400
  %1537 = vmatpush.bf16.msra.mxu0 %v1399
  %1538 = vmatpush.bf16.msra.mxu0 %v1398
  %1539 = vmatpush.bf16.msra.mxu0 %v1397
  %1540 = vmatmul.bf16.gmra.mxu0 %v926
  %v1541 = vpop.f32.mrf.mxu0
  %v1542 = vadd.f32 %v1528, %v1541
  %v1543 = vpop.f32.mrf.mxu0
  %v1544 = vadd.f32 %v1530, %v1543
  %1545 = vdwg.mxu0
  %1546 = vmatpush.bf16.msra.mxu0 %v1412
  %1547 = vmatpush.bf16.msra.mxu0 %v1411
  %1548 = vmatpush.bf16.msra.mxu0 %v1410
  %1549 = vmatpush.bf16.msra.mxu0 %v1409
  %1550 = vmatpush.bf16.msra.mxu0 %v1408
  %1551 = vmatpush.bf16.msra.mxu0 %v1407
  %1552 = vmatpush.bf16.msra.mxu0 %v1406
  %1553 = vmatpush.bf16.msra.mxu0 %v1405
  %1554 = vmatmul.bf16.gmra.mxu0 %v927
  %v1555 = vpop.f32.mrf.mxu0
  %v1556 = vadd.f32 %v1542, %v1555
  %v1557 = vpop.f32.mrf.mxu0
  %v1558 = vadd.f32 %v1544, %v1557
  %1559 = vdwg.mxu0
  %1560 = vmatpush.bf16.msra.mxu0 %v1420
  %1561 = vmatpush.bf16.msra.mxu0 %v1419
  %1562 = vmatpush.bf16.msra.mxu0 %v1418
  %1563 = vmatpush.bf16.msra.mxu0 %v1417
  %1564 = vmatpush.bf16.msra.mxu0 %v1416
  %1565 = vmatpush.bf16.msra.mxu0 %v1415
  %1566 = vmatpush.bf16.msra.mxu0 %v1414
  %1567 = vmatpush.bf16.msra.mxu0 %v1413
  %1568 = vmatmul.bf16.gmra.mxu0 %v928
  %v1569 = vpop.f32.mrf.mxu0
  %v1570 = vadd.f32 %v1556, %v1569
  %v1571 = vpop.f32.mrf.mxu0
  %v1572 = vadd.f32 %v1558, %v1571
  %1573 = vdwg.mxu0
  %1574 = vmatpush.bf16.msra.mxu0 %v1428
  %1575 = vmatpush.bf16.msra.mxu0 %v1427
  %1576 = vmatpush.bf16.msra.mxu0 %v1426
  %1577 = vmatpush.bf16.msra.mxu0 %v1425
  %1578 = vmatpush.bf16.msra.mxu0 %v1424
  %1579 = vmatpush.bf16.msra.mxu0 %v1423
  %1580 = vmatpush.bf16.msra.mxu0 %v1422
  %1581 = vmatpush.bf16.msra.mxu0 %v1421
  %1582 = vmatmul.bf16.gmra.mxu0 %v929
  %v1583 = vpop.f32.mrf.mxu0
  %v1584 = vadd.f32 %v1570, %v1583
  %v1585 = vpop.f32.mrf.mxu0
  %v1586 = vadd.f32 %v1572, %v1585
  %1587 = vdwg.mxu0
  %1588 = vmatpush.bf16.msra.mxu0 %v1436
  %1589 = vmatpush.bf16.msra.mxu0 %v1435
  %1590 = vmatpush.bf16.msra.mxu0 %v1434
  %1591 = vmatpush.bf16.msra.mxu0 %v1433
  %1592 = vmatpush.bf16.msra.mxu0 %v1432
  %1593 = vmatpush.bf16.msra.mxu0 %v1431
  %1594 = vmatpush.bf16.msra.mxu0 %v1430
  %1595 = vmatpush.bf16.msra.mxu0 %v1429
  %1596 = vmatmul.bf16.gmra.mxu0 %v930
  %v1597 = vpop.f32.mrf.mxu0
  %v1598 = vadd.f32 %v1584, %v1597
  %v1599 = vpop.f32.mrf.mxu0
  %v1600 = vadd.f32 %v1586, %v1599
  %1601 = vdwg.mxu0
  %1602 = vmatpush.bf16.msra.mxu0 0
  %1603 = vmatpush.bf16.msra.mxu0 0
  %1604 = vmatpush.bf16.msra.mxu0 0
  %1605 = vmatpush.bf16.msra.mxu0 0
  %1606 = vmatpush.bf16.msra.mxu0 %v1440
  %1607 = vmatpush.bf16.msra.mxu0 %v1439
  %1608 = vmatpush.bf16.msra.mxu0 %v1438
  %1609 = vmatpush.bf16.msra.mxu0 %v1437
  %1610 = vmatmul.bf16.gmra.mxu0 %v1502
  %v1611 = vpop.f32.mrf.mxu0
  %v1612 = vadd.f32 %v1598, %v1611
  %v1613 = vpop.f32.mrf.mxu0
  %v1614 = vadd.f32 %v1600, %v1613
  %1615 = vdwg.mxu0
  %v1616 = vld [vmem:[%s7] sm:$0x1]
  %v1618 = vperm.slane %v1616, 0
  %v1620 = vadd.f32 %v1612, %v1618
  %v1621 = vadd.f32 %v1614, %v1618
  %v1622 = vmax.f32 %v1620, 0.0
  %v1623 = vmax.f32 %v1621, 0.0
  %v1624 = vld [vmem:[%s8] sm:$0xf]
  %v1625 = vld [vmem:[%s8 + $0x4] sm:$0xf]
  %v1626 = vld [vmem:[%s8 + $0x8] sm:$0xf]
  %v1627 = vld [vmem:[%s8 + $0xc] sm:$0xf]
  %v1628 = vld [vmem:[%s8 + $0x10] sm:$0xf]
  %v1629 = vld [vmem:[%s8 + $0x14] sm:$0xf]
  %v1630 = vld [vmem:[%s8 + $0x18] sm:$0xf]
  %v1631 = vld [vmem:[%s8 + $0x1c] sm:$0xf]
  %v1632 = vld [vmem:[%s8 + $0x20] sm:$0xf]
  %v1633 = vld [vmem:[%s8 + $0x24] sm:$0xf]
  %v1634 = vld [vmem:[%s8 + $0x28] sm:$0xf]
  %v1635 = vld [vmem:[%s8 + $0x2c] sm:$0xf]
  %v1636 = vld [vmem:[%s8 + $0x30] sm:$0xf]
  %v1637 = vld [vmem:[%s8 + $0x34] sm:$0xf]
  %v1638 = vld [vmem:[%s8 + $0x38] sm:$0xf]
  %v1639 = vld [vmem:[%s8 + $0x3c] sm:$0xf]
  %v1640 = vpack.c.bf16 %v1623, %v1622
  %v1641 = vld [vmem:[%s9] sm:$0x1]
  %v1643 = vperm.slane %v1641, 0
  %v1661 = vunpack.c.l.b16 %v1624
  %v1662 = vunpack.c.l.b16 %v1625
  %v1663 = vunpack.c.l.b16 %v1626
  %v1664 = vunpack.c.l.b16 %v1627
  %v1665 = vunpack.c.l.b16 %v1628
  %v1666 = vunpack.c.l.b16 %v1629
  %v1667 = vunpack.c.l.b16 %v1630
  %v1668 = vunpack.c.l.b16 %v1631
  %v1669 = vunpack.c.l.b16 %v1632
  %v1670 = vunpack.c.l.b16 %v1633
  %v1671 = vunpack.c.l.b16 %v1634
  %v1672 = vunpack.c.l.b16 %v1635
  %v1673 = vunpack.c.l.b16 %v1636
  %v1674 = vunpack.c.l.b16 %v1637
  %v1675 = vunpack.c.l.b16 %v1638
  %v1676 = vunpack.c.l.b16 %v1639
  %v1677 = vpack.c.b16 %v1662, %v1661
  %v1678 = vpack.c.b16 %v1664, %v1663
  %v1679 = vpack.c.b16 %v1666, %v1665
  %v1680 = vpack.c.b16 %v1668, %v1667
  %v1681 = vpack.c.b16 %v1670, %v1669
  %v1682 = vpack.c.b16 %v1672, %v1671
  %v1683 = vpack.c.b16 %v1674, %v1673
  %v1684 = vpack.c.b16 %v1676, %v1675
  %1693 = vmatpush.bf16.msra.mxu0 %v1684
  %1694 = vmatpush.bf16.msra.mxu0 %v1683
  %1695 = vmatpush.bf16.msra.mxu0 %v1682
  %1696 = vmatpush.bf16.msra.mxu0 %v1681
  %1697 = vmatpush.bf16.msra.mxu0 %v1680
  %1698 = vmatpush.bf16.msra.mxu0 %v1679
  %1699 = vmatpush.bf16.msra.mxu0 %v1678
  %1700 = vmatpush.bf16.msra.mxu0 %v1677
  %1701 = vmatmul.bf16.gmra.mxu0 %v1640
  %v1702 = vpop.f32.mrf.mxu0
  %v1703 = vadd.f32 %v1643, %v1702
  %v1704 = vpop.f32.mrf.mxu0
  %v1705 = vadd.f32 %v1643, %v1704
  %1706 = vdwg.mxu0
  %v1707 = vmax.f32 %v1703, 0.0
  %v1708 = vmax.f32 %v1705, 0.0
  %v1709 = vld [vmem:[%s10] sm:$0xf]
  %v1710 = vld [vmem:[%s10 + $0x4] sm:$0xf]
  %v1711 = vld [vmem:[%s10 + $0x8] sm:$0xf]
  %v1712 = vld [vmem:[%s10 + $0xc] sm:$0xf]
  %v1713 = vld [vmem:[%s10 + $0x10] sm:$0xf]
  %v1714 = vld [vmem:[%s10 + $0x14] sm:$0xf]
  %v1715 = vld [vmem:[%s10 + $0x18] sm:$0xf]
  %v1716 = vld [vmem:[%s10 + $0x1c] sm:$0xf]
  %v1717 = vpack.c.bf16 %v1708, %v1707
  %v1718 = vld [vmem:[%s11] sm:$0x1]
  %v1720 = vperm.slane %v1718, 0
  %v1730 = vunpack.c.l.b16 %v1709
  %v1731 = vunpack.c.l.b16 %v1710
  %v1732 = vunpack.c.l.b16 %v1711
  %v1733 = vunpack.c.l.b16 %v1712
  %v1734 = vunpack.c.l.b16 %v1713
  %v1735 = vunpack.c.l.b16 %v1714
  %v1736 = vunpack.c.l.b16 %v1715
  %v1737 = vunpack.c.l.b16 %v1716
  %v1738 = vpack.c.b16 %v1731, %v1730
  %v1739 = vpack.c.b16 %v1733, %v1732
  %v1740 = vpack.c.b16 %v1735, %v1734
  %v1741 = vpack.c.b16 %v1737, %v1736
  %v1747 = vsel %vm1095, %v1717, 0
  %1749 = vmatpush.bf16.msra.mxu0 0
  %1750 = vmatpush.bf16.msra.mxu0 0
  %1751 = vmatpush.bf16.msra.mxu0 0
  %1752 = vmatpush.bf16.msra.mxu0 0
  %1753 = vmatpush.bf16.msra.mxu0 %v1741
  %1754 = vmatpush.bf16.msra.mxu0 %v1740
  %1755 = vmatpush.bf16.msra.mxu0 %v1739
  %1756 = vmatpush.bf16.msra.mxu0 %v1738
  %1757 = vmatmul.bf16.gmra.mxu0 %v1747
  %v1758 = vpop.f32.mrf.mxu0
  %v1759 = vadd.f32 %v1720, %v1758
  %v1760 = vpop.f32.mrf.mxu0
  %v1761 = vadd.f32 %v1720, %v1760
  %1762 = vdwg.mxu0
  %1763 = vst [vmem:[%s12] sm:$0xff] %v1759
  %1764 = vst [vmem:[%s12 + $0x8] sm:$0xff] %v1761
  // Predicated region
  $region50: #{ntcnn_pallas.1} parent=0 // pred_check
    _
  $region51: #{ntcnn_pallas.1} parent=0 // pred_check_branch
    %1766 = sbr.rel (0) target = $region53
  $region52: #{ntcnn_pallas.1} parent=0 // pred_region
    _
  $region53: #{ntcnn_pallas.1} parent=0 // pred_fallthru
    _
  // Predicated region
  $region54: #{ntcnn_pallas.1} parent=0 // pred_check
    _
  $region55: #{ntcnn_pallas.1} parent=0 // pred_check_branch
    %1768 = sbr.rel (0) target = $region57
  $region56: #{ntcnn_pallas.1} parent=0 // pred_region
    _
  $region57: #{ntcnn_pallas.1} parent=0 // pred_fallthru
    _

</llo_original>
